<compile_context>
chip_gen: v7x
topology: tpu7x:2x2x1
jax: 0.10.0
libtpu: 0.0.40
codegen_flags: <defaults>
</compile_context>

<pallas_src>
import jax
import jax.numpy as jnp
from jax.experimental import pallas as pl
from jax.experimental.pallas import tpu as pltpu


# ------------------------------ kernel -------------------------------------

def up_concat_kernel(xconv_ref, xup_ref, w_ref, b_ref, o_ref):
    """Fused ConvTranspose2d(k=2, s=2) + channel concat with the skip tensor.

    xconv_ref: (1, TH, 2, W, 2*Cs)         skip tile, packed (ky rows, kx lanes)
    xup_ref:   (1, TH, W, Cin)             low-res input tile (bf16)
    w_ref:     (Cin, 4*Cout)               taps packed as columns (ky, kx, co), bf16
    b_ref:     (1, 4*Cout)                 bias tiled per tap (f32)
    o_ref:     (1, TH, 2, W, 2*(Cs+Cout))  packed output; last dim = (kx, channel)
    """
    _, th, w_lo, cin = xup_ref.shape
    cs = xconv_ref.shape[4] // 2
    cout = w_ref.shape[1] // 4
    ctot = cs + cout

    # --- transposed conv: all four 2x2 taps in ONE MXU matmul (bf16, f32 acc) ---
    x = xup_ref[0].reshape(th * w_lo, cin)                        # (TH*W, Cin)
    y = jnp.dot(x, w_ref[...], preferred_element_type=jnp.float32) + b_ref[...]
    y = y.reshape(th, w_lo, 4 * cout)                             # lanes = (ky, kx, co)

    # --- skip connection: straight lane-slab copies (no strided gathers) ---
    o_ref[0, :, :, :, 0:cs] = xconv_ref[0, :, :, :, 0:cs]                 # kx = 0
    o_ref[0, :, :, :, ctot:ctot + cs] = xconv_ref[0, :, :, :, cs:2 * cs]  # kx = 1

    # --- up channels: direct stores, tap index k = 2*ky + kx ---
    o_ref[0, :, 0, :, cs:ctot]            = y[:, :, 0:cout]               # ky=0, kx=0
    o_ref[0, :, 0, :, ctot + cs:2 * ctot] = y[:, :, cout:2 * cout]        # ky=0, kx=1
    o_ref[0, :, 1, :, cs:ctot]            = y[:, :, 2 * cout:3 * cout]    # ky=1, kx=0
    o_ref[0, :, 1, :, ctot + cs:2 * ctot] = y[:, :, 3 * cout:4 * cout]    # ky=1, kx=1


# ------------------------------ tiling helpers -------------------------------

def _vmem_budget():
    """(per-step tile byte budget, scoped VMEM limit) sized per TPU generation."""
    cap = 64 * 1024 * 1024                      # conservative default (v7x per-TC)
    try:
        cap = int(getattr(pltpu.get_tpu_info(), "vmem_capacity_bytes", cap))
    except Exception:
        pass
    if cap >= 96 * 1024 * 1024:                 # v5e / v6e: 128 MiB VMEM
        return 20 * 1024 * 1024, 96 * 1024 * 1024
    return 6 * 1024 * 1024, 48 * 1024 * 1024    # v7x: 64 MiB / TC


def _pick_row_tile(h, w_lo, cin, cs, cout, target_bytes):
    """Largest divisor of H whose double-buffered tile set fits the byte budget."""
    ctot = cs + cout
    fixed = 2 * (cin * 4 * cout * 2 + 4 * cout * 4)     # dbl-buffered weights + bias

    def step_bytes(th):
        xup_b = th * w_lo * cin * 2                     # bf16 activation tile
        xconv_b = th * 2 * w_lo * 2 * cs * 4            # f32 skip tile
        out_b = th * 2 * w_lo * 2 * ctot * 4            # f32 packed output tile
        return fixed + 2 * (xup_b + xconv_b + out_b)    # double-buffered

    for d in range(h, 0, -1):
        if h % d == 0 and step_bytes(d) <= target_bytes:
            return d
    return 1


# ------------------------------ wrappers ------------------------------------

def up_forward_nhwc(params, xup_nhwc, xconv_nhwc):
    """Up.forward in NHWC: returns cat([xconv, convT(xup)], channel_last)."""
    n, h, w, cin = xup_nhwc.shape
    n2, h2, w2, cs = xconv_nhwc.shape
    assert (n2, h2, w2) == (n, 2 * h, 2 * w), (xup_nhwc.shape, xconv_nhwc.shape)
    cout4 = params["w_packed"].shape[1]
    cout = cout4 // 4
    ctot = cs + cout

    # NOTE: W should be a multiple of 8 for clean sublane retiling (true for
    # typical UNet feature maps; the test uses W = 16).
    target_bytes, vmem_limit = _vmem_budget()
    th = _pick_row_tile(h, w, cin, cs, cout, target_bytes)
    grid = (n, h // th)

    xup_bf = xup_nhwc.astype(jnp.bfloat16)           # bf16 activations to the MXU
    # contiguity-preserving (free) repack: (n,2h,2w,cs) -> (n,h,2,w,2cs);
    # last dim is (kx, channel), middle size-2 axis is ky.
    xconv_packed = xconv_nhwc.reshape(n, h, 2, w, 2 * cs)

    flops = 2 * n * h * w * cin * 4 * cout
    bytes_accessed = (n * h * w * cin * 2                 # xup (bf16)
                      + n * 2 * h * 2 * w * cs * 4        # skip (f32)
                      + n * 2 * h * 2 * w * ctot * 4      # output (f32)
                      + cin * cout4 * 2 + cout4 * 4)      # weights + bias

    out_packed = pl.pallas_call(
        up_concat_kernel,
        out_shape=jax.ShapeDtypeStruct((n, h, 2, w, 2 * ctot), jnp.float32),
        grid=grid,
        in_specs=[
            pl.BlockSpec((1, th, 2, w, 2 * cs), lambda i, t: (i, t, 0, 0, 0)),
            pl.BlockSpec((1, th, w, cin), lambda i, t: (i, t, 0, 0)),
            pl.BlockSpec((cin, cout4), lambda i, t: (0, 0)),
            pl.BlockSpec((1, cout4), lambda i, t: (0, 0)),
        ],
        out_specs=pl.BlockSpec((1, th, 2, w, 2 * ctot),
                               lambda i, t: (i, t, 0, 0, 0)),
        compiler_params=pltpu.CompilerParams(
            dimension_semantics=("parallel", "parallel"),
            vmem_limit_bytes=vmem_limit),
        cost_estimate=pl.CostEstimate(flops=flops, transcendentals=0,
                                      bytes_accessed=bytes_accessed),
    )(xconv_packed, xup_bf, params["w_packed"], params["b_packed"])

    # Contiguity-preserving (free) reshape: (n,h,2,w,2*ctot) -> (n,2h,2w,ctot).
    return out_packed.reshape(n, 2 * h, 2 * w, ctot)


def up_forward(params, xup_nchw, xconv_nchw):
    """PyTorch-layout entry point: NCHW in, NCHW out (layout glue at boundary).
    Prefer calling up_forward_nhwc directly if the surrounding model is NHWC."""
    xup = jnp.transpose(xup_nchw, (0, 2, 3, 1)).astype(jnp.bfloat16)  # fused cast
    xconv = jnp.transpose(xconv_nchw, (0, 2, 3, 1))
    out_nhwc = up_forward_nhwc(params, xup, xconv)
    return jnp.transpose(out_nhwc, (0, 3, 1, 2))


# ------------------------------ parameters ----------------------------------

def init_up_params(key, in_ch, out_ch):
    k1, k2 = jax.random.split(key)
    # torch ConvTranspose2d weight layout: (Cin, Cout, kH, kW)
    w = 0.02 * jax.random.normal(k1, (in_ch, out_ch, 2, 2), jnp.float32)
    b = 0.02 * jax.random.normal(k2, (out_ch,), jnp.float32)
    # pack the 4 taps as matmul columns ordered (ky, kx, co)
    w_packed = jnp.transpose(w, (0, 2, 3, 1)).reshape(in_ch, 4 * out_ch)
    return {
        "w_raw": w,                                   # kept for the reference check
        "b_raw": b,
        "w_packed": w_packed.astype(jnp.bfloat16),    # bf16 weights to the MXU
        "b_packed": jnp.tile(b, 4).reshape(1, 4 * out_ch).astype(jnp.float32),
    }


# ------------------------------ reference -----------------------------------

def up_reference_nchw(w, b, xup_nchw, xconv_nchw):
    """Pure-JAX (f32) reference for ConvTranspose2d(k=2,s=2) + channel concat."""
    up = jnp.einsum('nihw,ioyx->nohywx', xup_nchw, w)      # (N, Co, H, 2, W, 2)
    n, co, h, _, w_lo, _ = up.shape
    up = up.reshape(n, co, 2 * h, 2 * w_lo) + b[None, :, None, None]
    return jnp.concatenate([xconv_nchw, up], axis=1)


# ------------------------------ main ----------------------------------------

if __name__ == "__main__":
    key = jax.random.PRNGKey(0)
    kp, kx1, kx2 = jax.random.split(key, 3)

    # small shapes consistent with the module: Up(64, 32); skip has 32 channels
    N, IN_CH, OUT_CH, SKIP_CH = 2, 64, 32, 32
    H, W = 16, 16                         # low-res (xup) spatial; skip is 32x32

    params = init_up_params(kp, IN_CH, OUT_CH)
    xup = jax.random.normal(kx1, (N, IN_CH, H, W), jnp.float32)
    xconv = jax.random.normal(kx2, (N, SKIP_CH, 2 * H, 2 * W), jnp.float32)

    fwd = jax.jit(up_forward)
    out = jax.block_until_ready(fwd(params, xup, xconv))

    assert out.shape == (N, SKIP_CH + OUT_CH, 2 * H, 2 * W), out.shape
    assert jnp.all(jnp.isfinite(out))

    # verify against the f32 reference (bf16 matmul inputs -> loose tolerance)
    ref = up_reference_nchw(params["w_raw"], params["b_raw"], xup, xconv)
    max_err = float(jnp.max(jnp.abs(out - ref)))
    assert max_err < 2e-2, max_err

    print("KERNEL_OK")
</pallas_src>

<mosaic_0001>
module attributes {stable_mosaic.version = 11 : i64} {
  func.func @up_concat_kernel(%arg0: i32, %arg1: i32, %arg2: memref<1x16x2x16x64xf32, #tpu.memory_space<vmem>>, %arg3: memref<1x16x16x64xbf16, #tpu.memory_space<vmem>>, %arg4: memref<64x128xbf16, #tpu.memory_space<vmem>>, %arg5: memref<1x128xf32, #tpu.memory_space<vmem>>, %arg6: memref<1x16x2x16x128xf32, #tpu.memory_space<vmem>>) attributes {dimension_semantics = [#tpu.dimension_semantics<parallel>, #tpu.dimension_semantics<parallel>], iteration_bounds = array<i64: 2, 1>, scalar_prefetch = 0 : i64, scratch_operands = 0 : i64, tpu.core_type = #tpu.core_type<tc>, window_params = [{transform_indices = @transform_0, window_bounds = array<i64: 1, 16, 2, 16, 64>}, {transform_indices = @transform_1, window_bounds = array<i64: 1, 16, 16, 64>}, {pipeline_mode = #tpu.pipeline_mode<synchronous>, transform_indices = @transform_2, window_bounds = array<i64: 64, 128>}, {pipeline_mode = #tpu.pipeline_mode<synchronous>, transform_indices = @transform_3, window_bounds = array<i64: 1, 128>}, {transform_indices = @transform_4, window_bounds = array<i64: 1, 16, 2, 16, 128>}]} {
    %c0 = arith.constant 0 : index
    %c0_0 = arith.constant 0 : index
    %c0_1 = arith.constant 0 : index
    %c0_2 = arith.constant 0 : index
    %0 = vector.load %arg3[%c0, %c0_0, %c0_1, %c0_2] : memref<1x16x16x64xbf16, #tpu.memory_space<vmem>>, vector<1x16x16x64xbf16>
    %1 = vector.shape_cast %0 : vector<1x16x16x64xbf16> to vector<16x16x64xbf16>
    %2 = vector.shape_cast %1 : vector<16x16x64xbf16> to vector<256x64xbf16>
    %c0_3 = arith.constant 0 : index
    %c0_4 = arith.constant 0 : index
    %3 = vector.load %arg4[%c0_3, %c0_4] : memref<64x128xbf16, #tpu.memory_space<vmem>>, vector<64x128xbf16>
    %cst = arith.constant dense<0.000000e+00> : vector<256x128xf32>
    %4 = tpu.matmul %2, %3, %cst {dimension_numbers = #tpu.dot_dimension_numbers<[1], [0], [0], [1], [0, 0, 1, 1], [], []>} : vector<256x64xbf16>, vector<64x128xbf16>, vector<256x128xf32> -> vector<256x128xf32>
    %c0_5 = arith.constant 0 : index
    %c0_6 = arith.constant 0 : index
    %5 = vector.load %arg5[%c0_5, %c0_6] : memref<1x128xf32, #tpu.memory_space<vmem>>, vector<1x128xf32>
    %6 = vector.broadcast %5 : vector<1x128xf32> to vector<256x128xf32>
    %7 = arith.addf %4, %6 : vector<256x128xf32>
    %8 = vector.shape_cast %7 : vector<256x128xf32> to vector<16x16x128xf32>
    %c0_7 = arith.constant 0 : index
    %c0_8 = arith.constant 0 : index
    %c0_9 = arith.constant 0 : index
    %c0_10 = arith.constant 0 : index
    %c0_11 = arith.constant 0 : index
    %9 = vector.load %arg2[%c0_7, %c0_8, %c0_9, %c0_10, %c0_11] : memref<1x16x2x16x64xf32, #tpu.memory_space<vmem>>, vector<1x16x2x16x32xf32>
    %10 = vector.shape_cast %9 : vector<1x16x2x16x32xf32> to vector<16x2x16x32xf32>
    %c0_12 = arith.constant 0 : index
    %c0_13 = arith.constant 0 : index
    %c0_14 = arith.constant 0 : index
    %c0_15 = arith.constant 0 : index
    %c0_16 = arith.constant 0 : index
    %11 = vector.load %arg6[%c0_12, %c0_13, %c0_14, %c0_15, %c0_16] : memref<1x16x2x16x128xf32, #tpu.memory_space<vmem>>, vector<1x16x2x16x32xf32>
    %12 = vector.shape_cast %11 : vector<1x16x2x16x32xf32> to vector<16x2x16x32xf32>
    %13 = vector.shape_cast %10 : vector<16x2x16x32xf32> to vector<1x16x2x16x32xf32>
    tpu.vector_store %arg6[%c0_12, %c0_13, %c0_14, %c0_15, %c0_16], %13 {strides = array<i32>} : memref<1x16x2x16x128xf32, #tpu.memory_space<vmem>>, vector<1x16x2x16x32xf32>,
    %c0_17 = arith.constant 0 : index
    %c0_18 = arith.constant 0 : index
    %c0_19 = arith.constant 0 : index
    %c0_20 = arith.constant 0 : index
    %c32 = arith.constant 32 : index
    %14 = vector.load %arg2[%c0_17, %c0_18, %c0_19, %c0_20, %c32] : memref<1x16x2x16x64xf32, #tpu.memory_space<vmem>>, vector<1x16x2x16x32xf32>
    %15 = vector.shape_cast %14 : vector<1x16x2x16x32xf32> to vector<16x2x16x32xf32>
    %c0_21 = arith.constant 0 : index
    %c0_22 = arith.constant 0 : index
    %c0_23 = arith.constant 0 : index
    %c0_24 = arith.constant 0 : index
    %c64 = arith.constant 64 : index
    %16 = vector.load %arg6[%c0_21, %c0_22, %c0_23, %c0_24, %c64] : memref<1x16x2x16x128xf32, #tpu.memory_space<vmem>>, vector<1x16x2x16x32xf32>
    %17 = vector.shape_cast %16 : vector<1x16x2x16x32xf32> to vector<16x2x16x32xf32>
    %18 = vector.shape_cast %15 : vector<16x2x16x32xf32> to vector<1x16x2x16x32xf32>
    tpu.vector_store %arg6[%c0_21, %c0_22, %c0_23, %c0_24, %c64], %18 {strides = array<i32>} : memref<1x16x2x16x128xf32, #tpu.memory_space<vmem>>, vector<1x16x2x16x32xf32>,
    %19 = vector.extract_strided_slice %8 {offsets = [0, 0, 0], sizes = [16, 16, 32], strides = [1, 1, 1]} : vector<16x16x128xf32> to vector<16x16x32xf32>
    %c0_25 = arith.constant 0 : index
    %c0_26 = arith.constant 0 : index
    %c0_27 = arith.constant 0 : index
    %c0_28 = arith.constant 0 : index
    %c32_29 = arith.constant 32 : index
    %20 = vector.load %arg6[%c0_25, %c0_26, %c0_27, %c0_28, %c32_29] : memref<1x16x2x16x128xf32, #tpu.memory_space<vmem>>, vector<1x16x1x16x32xf32>
    %21 = vector.shape_cast %20 : vector<1x16x1x16x32xf32> to vector<16x16x32xf32>
    %22 = vector.shape_cast %19 : vector<16x16x32xf32> to vector<1x16x1x16x32xf32>
    tpu.vector_store %arg6[%c0_25, %c0_26, %c0_27, %c0_28, %c32_29], %22 {strides = array<i32>} : memref<1x16x2x16x128xf32, #tpu.memory_space<vmem>>, vector<1x16x1x16x32xf32>,
    %23 = vector.extract_strided_slice %8 {offsets = [0, 0, 32], sizes = [16, 16, 32], strides = [1, 1, 1]} : vector<16x16x128xf32> to vector<16x16x32xf32>
    %c0_30 = arith.constant 0 : index
    %c0_31 = arith.constant 0 : index
    %c0_32 = arith.constant 0 : index
    %c0_33 = arith.constant 0 : index
    %c96 = arith.constant 96 : index
    %24 = vector.load %arg6[%c0_30, %c0_31, %c0_32, %c0_33, %c96] : memref<1x16x2x16x128xf32, #tpu.memory_space<vmem>>, vector<1x16x1x16x32xf32>
    %25 = vector.shape_cast %24 : vector<1x16x1x16x32xf32> to vector<16x16x32xf32>
    %26 = vector.shape_cast %23 : vector<16x16x32xf32> to vector<1x16x1x16x32xf32>
    tpu.vector_store %arg6[%c0_30, %c0_31, %c0_32, %c0_33, %c96], %26 {strides = array<i32>} : memref<1x16x2x16x128xf32, #tpu.memory_space<vmem>>, vector<1x16x1x16x32xf32>,
    %27 = vector.extract_strided_slice %8 {offsets = [0, 0, 64], sizes = [16, 16, 32], strides = [1, 1, 1]} : vector<16x16x128xf32> to vector<16x16x32xf32>
    %c0_34 = arith.constant 0 : index
    %c0_35 = arith.constant 0 : index
    %c1 = arith.constant 1 : index
    %c0_36 = arith.constant 0 : index
    %c32_37 = arith.constant 32 : index
    %28 = vector.load %arg6[%c0_34, %c0_35, %c1, %c0_36, %c32_37] : memref<1x16x2x16x128xf32, #tpu.memory_space<vmem>>, vector<1x16x1x16x32xf32>
    %29 = vector.shape_cast %28 : vector<1x16x1x16x32xf32> to vector<16x16x32xf32>
    %30 = vector.shape_cast %27 : vector<16x16x32xf32> to vector<1x16x1x16x32xf32>
    tpu.vector_store %arg6[%c0_34, %c0_35, %c1, %c0_36, %c32_37], %30 {strides = array<i32>} : memref<1x16x2x16x128xf32, #tpu.memory_space<vmem>>, vector<1x16x1x16x32xf32>,
    %31 = vector.extract_strided_slice %8 {offsets = [0, 0, 96], sizes = [16, 16, 32], strides = [1, 1, 1]} : vector<16x16x128xf32> to vector<16x16x32xf32>
    %c0_38 = arith.constant 0 : index
    %c0_39 = arith.constant 0 : index
    %c1_40 = arith.constant 1 : index
    %c0_41 = arith.constant 0 : index
    %c96_42 = arith.constant 96 : index
    %32 = vector.load %arg6[%c0_38, %c0_39, %c1_40, %c0_41, %c96_42] : memref<1x16x2x16x128xf32, #tpu.memory_space<vmem>>, vector<1x16x1x16x32xf32>
    %33 = vector.shape_cast %32 : vector<1x16x1x16x32xf32> to vector<16x16x32xf32>
    %34 = vector.shape_cast %31 : vector<16x16x32xf32> to vector<1x16x1x16x32xf32>
    tpu.vector_store %arg6[%c0_38, %c0_39, %c1_40, %c0_41, %c96_42], %34 {strides = array<i32>} : memref<1x16x2x16x128xf32, #tpu.memory_space<vmem>>, vector<1x16x1x16x32xf32>,
    return
  }
  func.func @transform_0(%arg0: i32, %arg1: i32) -> (i32, i32, i32, i32, i32) {
    %c0_i32 = arith.constant 0 : i32
    %c0_i32_0 = arith.constant 0 : i32
    %c0_i32_1 = arith.constant 0 : i32
    %c0_i32_2 = arith.constant 0 : i32
    return %arg0, %arg1, %c0_i32, %c0_i32_0, %c0_i32_1 : i32, i32, i32, i32, i32
  }
  func.func @transform_1(%arg0: i32, %arg1: i32) -> (i32, i32, i32, i32) {
    %c0_i32 = arith.constant 0 : i32
    %c0_i32_0 = arith.constant 0 : i32
    %c0_i32_1 = arith.constant 0 : i32
    return %arg0, %arg1, %c0_i32, %c0_i32_0 : i32, i32, i32, i32
  }
  func.func @transform_2(%arg0: i32, %arg1: i32) -> (i32, i32) {
    %c0_i32 = arith.constant 0 : i32
    %c0_i32_0 = arith.constant 0 : i32
    %c0_i32_1 = arith.constant 0 : i32
    return %c0_i32, %c0_i32_0 : i32, i32
  }
  func.func @transform_3(%arg0: i32, %arg1: i32) -> (i32, i32) {
    %c0_i32 = arith.constant 0 : i32
    %c0_i32_0 = arith.constant 0 : i32
    %c0_i32_1 = arith.constant 0 : i32
    return %c0_i32, %c0_i32_0 : i32, i32
  }
  func.func @transform_4(%arg0: i32, %arg1: i32) -> (i32, i32, i32, i32, i32) {
    %c0_i32 = arith.constant 0 : i32
    %c0_i32_0 = arith.constant 0 : i32
    %c0_i32_1 = arith.constant 0 : i32
    %c0_i32_2 = arith.constant 0 : i32
    return %arg0, %arg1, %c0_i32, %c0_i32_0, %c0_i32_1 : i32, i32, i32, i32, i32
  }
}

</mosaic_0001>

<llo_original>
// kernel: up_forward.1
$region0: #{up_forward.1}
  #allocation0 [shape = 'u32[]', space=smem, size = 0x4, offset = 0x4, fixed_abs, tag = 'smem constant byte address 0x4 - core index']
  #allocation1 [shape = 'u32[144,128]{1,0:T(1,128)}', space=vmem, size = 0x12000, scoped, tag = 'internal scratch']
  %s0 = inlined_call_operand.vmem [shape: f32[2,16,2,16,64], index: 0, kind: input, shape index: {}]
  %s1 = inlined_call_operand.vmem [shape: bf16[2,16,16,64], index: 1, kind: input, shape index: {}]
  %s2 = inlined_call_operand.vmem [shape: bf16[64,128], index: 2, kind: input, shape index: {}]
  %s3 = inlined_call_operand.vmem [shape: f32[1,128], index: 3, kind: input, shape index: {}]
  %s4 = inlined_call_operand.vmem [shape: f32[2,16,2,16,128], index: 4, kind: output, shape index: {}]
  %s5 = sld [smem:[#allocation0]]
  $region49: #{up_forward.1} parent=0
    _
  %s7 = ssub.s32 1, %s5
  %s8 = scalar_select 0, %s7, %s5
  loop: start=0, step=1, limit=4
  $region2: #{up_forward.1} parent=0 // loop_pre_header
    _
  $region3: #{up_forward.1} parent=0 // loop_header
    %s10 = sphi 0, %s14
    %p11 = scmp.ge.s32.totalorder %s10, 4
    %s17 = sphi 0, %s29
    %s18 = sphi 0, %s25
    %s19 = sphi 0, %s17
    %s20 = sphi 0, %s18
    %s21 = sphi 0, %s19
    %s22 = sphi 0, %s20
    %s34 = sphi 0, %s36
    %s37 = sphi 0, %s34
    %s38 = sphi 0, %s37
    %s54 = sphi 0, %s38
    %s62 = sphi 0, %s64
    %s65 = sphi 0, %s62
    %s66 = sphi 0, %s65
    %s82 = sphi 0, %s66
    %s86 = sphi 0, %s86
    %s88 = sphi 0, %s86
    %s89 = sphi 0, %s88
    %s103 = sphi 0, %s89
    %s107 = sphi 0, %s107
    %s109 = sphi 0, %s107
    %s110 = sphi 0, %s109
    %s124 = sphi 0, %s110
    %s132 = sphi 0, %s134
    %s135 = sphi 0, %s132
    %s136 = sphi 0, %s135
    %s152 = sphi 0, %s136
  $region4: #{up_forward.1} parent=0 // loop_header_branch
    %13 = sbr.rel (%p11) target = $region8
  $region5: #{up_forward.1} parent=0 // loop_body
    %s15 = ssub.s32 %s10, 1
    %s16 = ssub.s32 %s10, 2
    %s23 = sadd.s32 1, %s18
    %p24 = scmp.ge.s32.totalorder %s23, 1
    %s25 = scalar_select %p24, 0, %s23
    %s26 = sadd.s32 1, %s17
    %s27 = scalar_select %p24, %s26, %s17
    %p28 = scmp.ge.s32.totalorder %s27, 2
    %s29 = scalar_select %p28, 0, %s27
    %s30 = ssub.s32 %s17, %s29
    %s31 = ssub.s32 %s18, %s25
    %s32 = sor.u32 %s30, %s31
    %p33 = scmp.eq.s32.totalorder %s32, 0
    %s35 = sadd.s32 %s34, 1
    %s36 = scalar_select %p33, %s34, %s35
    %p39 = pneg %p33
    %p40 = scmp.eq.s32.totalorder %s10, 1
    %p41 = por %p39, %p40
    %p42 = scmp.ne.s32.totalorder %s34, %s37
    %p43 = scmp.eq.s32.totalorder %s10, 0
    %p44 = por %p42, %p43
    %p45 = scmp.ne.s32.totalorder %s34, %s37
    %p46 = scmp.eq.s32.totalorder %s15, 1
    %p47 = por %p45, %p46
    %p48 = scmp.ne.s32.totalorder %s37, %s38
    %p49 = scmp.eq.s32.totalorder %s15, 0
    %p50 = por %p48, %p49
    %p51 = scmp.ne.s32.totalorder %s37, %s38
    %p52 = scmp.eq.s32.totalorder %s16, 1
    %p53 = por %p51, %p52
    %p55 = scmp.ne.s32.totalorder %s38, %s54
    %p56 = scmp.eq.s32.totalorder %s16, 0
    %p57 = por %p55, %p56
    %s58 = ssub.s32 %s17, %s29
    %s59 = ssub.s32 %s18, %s25
    %s60 = sor.u32 %s58, %s59
    %p61 = scmp.eq.s32.totalorder %s60, 0
    %s63 = sadd.s32 %s62, 1
    %s64 = scalar_select %p61, %s62, %s63
    %p67 = pneg %p61
    %p68 = scmp.eq.s32.totalorder %s10, 1
    %p69 = por %p67, %p68
    %p70 = scmp.ne.s32.totalorder %s62, %s65
    %p71 = scmp.eq.s32.totalorder %s10, 0
    %p72 = por %p70, %p71
    %p73 = scmp.ne.s32.totalorder %s62, %s65
    %p74 = scmp.eq.s32.totalorder %s15, 1
    %p75 = por %p73, %p74
    %p76 = scmp.ne.s32.totalorder %s65, %s66
    %p77 = scmp.eq.s32.totalorder %s15, 0
    %p78 = por %p76, %p77
    %p79 = scmp.ne.s32.totalorder %s65, %s66
    %p80 = scmp.eq.s32.totalorder %s16, 1
    %p81 = por %p79, %p80
    %p83 = scmp.ne.s32.totalorder %s66, %s82
    %p84 = scmp.eq.s32.totalorder %s16, 0
    %p85 = por %p83, %p84
    %s87 = sadd.s32 %s86, 1
    %p90 = scmp.eq.s32.totalorder %s10, 1
    %p91 = scmp.ne.s32.totalorder %s86, %s88
    %p92 = scmp.eq.s32.totalorder %s10, 0
    %p93 = por %p91, %p92
    %p94 = scmp.ne.s32.totalorder %s86, %s88
    %p95 = scmp.eq.s32.totalorder %s15, 1
    %p96 = por %p94, %p95
    %p97 = scmp.ne.s32.totalorder %s88, %s89
    %p98 = scmp.eq.s32.totalorder %s15, 0
    %p99 = por %p97, %p98
    %p100 = scmp.ne.s32.totalorder %s88, %s89
    %p101 = scmp.eq.s32.totalorder %s16, 1
    %p102 = por %p100, %p101
    %p104 = scmp.ne.s32.totalorder %s89, %s103
    %p105 = scmp.eq.s32.totalorder %s16, 0
    %p106 = por %p104, %p105
    %s108 = sadd.s32 %s107, 1
    %p111 = scmp.eq.s32.totalorder %s10, 1
    %p112 = scmp.ne.s32.totalorder %s107, %s109
    %p113 = scmp.eq.s32.totalorder %s10, 0
    %p114 = por %p112, %p113
    %p115 = scmp.ne.s32.totalorder %s107, %s109
    %p116 = scmp.eq.s32.totalorder %s15, 1
    %p117 = por %p115, %p116
    %p118 = scmp.ne.s32.totalorder %s109, %s110
    %p119 = scmp.eq.s32.totalorder %s15, 0
    %p120 = por %p118, %p119
    %p121 = scmp.ne.s32.totalorder %s109, %s110
    %p122 = scmp.eq.s32.totalorder %s16, 1
    %p123 = por %p121, %p122
    %p125 = scmp.ne.s32.totalorder %s110, %s124
    %p126 = scmp.eq.s32.totalorder %s16, 0
    %p127 = por %p125, %p126
    %s128 = ssub.s32 %s17, %s29
    %s129 = ssub.s32 %s18, %s25
    %s130 = sor.u32 %s128, %s129
    %p131 = scmp.eq.s32.totalorder %s130, 0
    %s133 = sadd.s32 %s132, 1
    %s134 = scalar_select %p131, %s132, %s133
    %p137 = pneg %p131
    %p138 = scmp.eq.s32.totalorder %s10, 1
    %p139 = por %p137, %p138
    %p140 = scmp.ne.s32.totalorder %s132, %s135
    %p141 = scmp.eq.s32.totalorder %s10, 0
    %p142 = por %p140, %p141
    %p143 = scmp.ne.s32.totalorder %s132, %s135
    %p144 = scmp.eq.s32.totalorder %s15, 1
    %p145 = por %p143, %p144
    %p146 = scmp.ne.s32.totalorder %s135, %s136
    %p147 = scmp.eq.s32.totalorder %s15, 0
    %p148 = por %p146, %p147
    %p149 = scmp.ne.s32.totalorder %s135, %s136
    %p150 = scmp.eq.s32.totalorder %s16, 1
    %p151 = por %p149, %p150
    %p153 = scmp.ne.s32.totalorder %s136, %s152
    %p154 = scmp.eq.s32.totalorder %s16, 0
    %p155 = por %p153, %p154
    %p156 = scmp.le.s32.totalorder 1, %s10
    %p157 = scmp.lt.s32.totalorder %s10, 3
    %p158 = pnand %p156, %p157
    %p159 = pneg %p158
    // Predicated region
    $region9: #{up_forward.1} parent=5 // pred_check
      _
    $region10: #{up_forward.1} parent=5 // pred_check_branch
      %161 = sbr.rel (%p158) target = $region12
    $region11: #{up_forward.1} parent=5 // pred_region
      %s162 = ssub.s32 %s10, 1
      // Predicated region
      $region13: #{up_forward.1} parent=11 // pred_check
        %p163 = pneg %p99
      $region14: #{up_forward.1} parent=11 // pred_check_branch
        %165 = sbr.rel (%p163) target = $region16
      $region15: #{up_forward.1} parent=11 // pred_region
        _
      $region16: #{up_forward.1} parent=11 // pred_fallthru
        _
      // Predicated region
      $region17: #{up_forward.1} parent=11 // pred_check
        %p166 = pneg %p120
      $region18: #{up_forward.1} parent=11 // pred_check_branch
        %168 = sbr.rel (%p166) target = $region20
      $region19: #{up_forward.1} parent=11 // pred_region
        _
      $region20: #{up_forward.1} parent=11 // pred_fallthru
        _
    $region12: #{up_forward.1} parent=5 // pred_fallthru
      _
    %p169 = scmp.lt.s32.totalorder %s10, 2
    // Predicated region
    $region21: #{up_forward.1} parent=5 // pred_check
      %p170 = pneg %p169
    $region22: #{up_forward.1} parent=5 // pred_check_branch
      %172 = sbr.rel (%p170) target = $region24
    $region23: #{up_forward.1} parent=5 // pred_region
      // Predicated region
      $region25: #{up_forward.1} parent=23 // pred_check
        %p173 = pneg %p44
      $region26: #{up_forward.1} parent=23 // pred_check_branch
        %175 = sbr.rel (%p173) target = $region28
      $region27: #{up_forward.1} parent=23 // pred_region
        %s176 = smul.u32 16, %s18
        %p177 = scmp.lt.s32.totalorder %s17, 1
        %s178 = scalar_select %p177, %s17, 1
        %p179 = scmp.lt.s32.totalorder %s176, 15
        %s180 = scalar_select %p179, %s176, 15
        %s181 = smul.addr %s180, 4
        %s182 = smul.addr %s178, 64
        %s183 = sadd.s32 %s181, %s182
        %s184 = smul.addr %s183, 8
        %s185 = scalar_lea.vmem %s0, %s184
        %s186 = smul.u32 16, %s18
      $region28: #{up_forward.1} parent=23 // pred_fallthru
        _
      // Predicated region
      $region29: #{up_forward.1} parent=23 // pred_check
        %p187 = pneg %p72
      $region30: #{up_forward.1} parent=23 // pred_check_branch
        %189 = sbr.rel (%p187) target = $region32
      $region31: #{up_forward.1} parent=23 // pred_region
        %s190 = smul.u32 16, %s18
        %p191 = scmp.lt.s32.totalorder %s17, 1
        %s192 = scalar_select %p191, %s17, 1
        %p193 = scmp.lt.s32.totalorder %s190, 15
        %s194 = scalar_select %p193, %s190, 15
        %s195 = smul.addr %s194, 2
        %s196 = smul.addr %s192, 32
        %s197 = sadd.s32 %s195, %s196
        %s198 = smul.addr %s197, 4
        %s199 = scalar_lea.vmem %s1, %s198
        %s200 = smul.u32 16, %s18
      $region32: #{up_forward.1} parent=23 // pred_fallthru
        _
    $region24: #{up_forward.1} parent=5 // pred_fallthru
      _
    %p201 = scmp.le.s32.totalorder 1, %s10
    %p202 = scmp.lt.s32.totalorder %s10, 3
    %p203 = pnand %p201, %p202
    %p204 = pneg %p203
    // Predicated region
    $region33: #{up_forward.1} parent=5 // pred_check
      _
    $region34: #{up_forward.1} parent=5 // pred_check_branch
      %206 = sbr.rel (%p203) target = $region36
    $region35: #{up_forward.1} parent=5 // pred_region
      %s207 = ssub.s32 %s10, 1
      %s208 = smul.u32 16, %s20
      %p209 = scmp.lt.s32.totalorder %s19, 1
      %s210 = scalar_select %p209, %s19, 1
      %p211 = scmp.lt.s32.totalorder %s208, 15
      %s212 = scalar_select %p211, %s208, 15
      %s213 = smul.addr %s212, 4
      %s214 = smul.addr %s210, 64
      %s215 = sadd.s32 %s213, %s214
      %s216 = smul.addr %s215, 8
      %s217 = scalar_lea.vmem %s0, %s216
      %p218 = pneg %p50
      %p219 = pneg %p47
      %s220 = smul.u32 16, %s20
      %p221 = scmp.lt.s32.totalorder %s19, 1
      %s222 = scalar_select %p221, %s19, 1
      %p223 = scmp.lt.s32.totalorder %s220, 15
      %s224 = scalar_select %p223, %s220, 15
      %s225 = smul.addr %s224, 2
      %s226 = smul.addr %s222, 32
      %s227 = sadd.s32 %s225, %s226
      %s228 = smul.addr %s227, 4
      %s229 = scalar_lea.vmem %s1, %s228
      %p230 = pneg %p78
      %p231 = pneg %p75
      %p232 = pneg %p99
      %p233 = pneg %p96
      %p234 = pneg %p120
      %p235 = pneg %p117
      %p236 = pneg %p148
      %p237 = pneg %p145
      %s238 = smul.u32 16, %s20
      %p239 = scmp.lt.s32.totalorder %s19, 1
      %s240 = scalar_select %p239, %s19, 1
      %p241 = scmp.lt.s32.totalorder %s238, 15
      %s242 = scalar_select %p241, %s238, 15
      %s243 = smul.addr %s242, 4
      %s244 = smul.addr %s240, 64
      %s245 = sadd.s32 %s243, %s244
      %s246 = smul.addr %s245, 8
      %s247 = scalar_lea.vmem %s4, %s246
      %s248 = smul.u32 16, %s20
      %p249 = scmp.lt.s32.totalorder %s19, 1
      %s250 = scalar_select %p249, %s19, 1
      %p251 = scmp.lt.s32.totalorder %s248, 15
      %s252 = scalar_select %p251, %s248, 15
      %s253 = smul.addr %s252, 4
      %s254 = smul.addr %s250, 64
      %s255 = sadd.s32 %s253, %s254
      %s256 = smul.addr %s255, 8
      %s257 = scalar_lea.vmem %s0, %s256
      %s258 = smul.u32 16, %s20
      %s259 = smul.u32 16, %s20
      %p260 = scmp.lt.s32.totalorder %s19, 1
      %s261 = scalar_select %p260, %s19, 1
      %p262 = scmp.lt.s32.totalorder %s259, 15
      %s263 = scalar_select %p262, %s259, 15
      %s264 = smul.addr %s263, 2
      %s265 = smul.addr %s261, 32
      %s266 = sadd.s32 %s264, %s265
      %s267 = smul.addr %s266, 4
      %s268 = scalar_lea.vmem %s1, %s267
      %s269 = smul.u32 16, %s20
      %s270 = smul.u32 16, %s20
      %p271 = scmp.lt.s32.totalorder %s19, 1
      %s272 = scalar_select %p271, %s19, 1
      %p273 = scmp.lt.s32.totalorder %s270, 15
      %s274 = scalar_select %p273, %s270, 15
      %s275 = smul.addr %s274, 4
      %s276 = smul.addr %s272, 64
      %s277 = sadd.s32 %s275, %s276
      %s278 = smul.addr %s277, 8
      %s279 = scalar_lea.vmem %s4, %s278
      %s280 = smul.u32 16, %s20
      %v282 = vld [vmem:[%s268] sm:$0xf]
      %v283 = vld [vmem:[%s268 + $0x4] sm:$0xf]
      %v284 = vld [vmem:[%s268 + $0x8] sm:$0xf]
      %v285 = vld [vmem:[%s268 + $0xc] sm:$0xf]
      %v286 = vld [vmem:[%s268 + $0x10] sm:$0xf]
      %v287 = vld [vmem:[%s268 + $0x14] sm:$0xf]
      %v288 = vld [vmem:[%s268 + $0x18] sm:$0xf]
      %v289 = vld [vmem:[%s268 + $0x1c] sm:$0xf]
      %v290 = vld [vmem:[%s268 + $0x20] sm:$0xf]
      %v291 = vld [vmem:[%s268 + $0x24] sm:$0xf]
      %v292 = vld [vmem:[%s268 + $0x28] sm:$0xf]
      %v293 = vld [vmem:[%s268 + $0x2c] sm:$0xf]
      %v294 = vld [vmem:[%s268 + $0x30] sm:$0xf]
      %v295 = vld [vmem:[%s268 + $0x34] sm:$0xf]
      %v296 = vld [vmem:[%s268 + $0x38] sm:$0xf]
      %v297 = vld [vmem:[%s268 + $0x3c] sm:$0xf]
      %v298 = vld [vmem:[%s268 + $0x40] sm:$0xf]
      %v299 = vld [vmem:[%s268 + $0x44] sm:$0xf]
      %v300 = vld [vmem:[%s268 + $0x48] sm:$0xf]
      %v301 = vld [vmem:[%s268 + $0x4c] sm:$0xf]
      %v302 = vld [vmem:[%s268 + $0x50] sm:$0xf]
      %v303 = vld [vmem:[%s268 + $0x54] sm:$0xf]
      %v304 = vld [vmem:[%s268 + $0x58] sm:$0xf]
      %v305 = vld [vmem:[%s268 + $0x5c] sm:$0xf]
      %v306 = vld [vmem:[%s268 + $0x60] sm:$0xf]
      %v307 = vld [vmem:[%s268 + $0x64] sm:$0xf]
      %v308 = vld [vmem:[%s268 + $0x68] sm:$0xf]
      %v309 = vld [vmem:[%s268 + $0x6c] sm:$0xf]
      %v310 = vld [vmem:[%s268 + $0x70] sm:$0xf]
      %v311 = vld [vmem:[%s268 + $0x74] sm:$0xf]
      %v312 = vld [vmem:[%s268 + $0x78] sm:$0xf]
      %v313 = vld [vmem:[%s268 + $0x7c] sm:$0xf]
      %v314 = vld [vmem:[%s2] sm:$0xf]
      %v315 = vld [vmem:[%s2 + $0x4] sm:$0xf]
      %v316 = vld [vmem:[%s2 + $0x8] sm:$0xf]
      %v317 = vld [vmem:[%s2 + $0xc] sm:$0xf]
      %v318 = vld [vmem:[%s2 + $0x10] sm:$0xf]
      %v319 = vld [vmem:[%s2 + $0x14] sm:$0xf]
      %v320 = vld [vmem:[%s2 + $0x18] sm:$0xf]
      %v321 = vld [vmem:[%s2 + $0x1c] sm:$0xf]
      %v322 = vld [vmem:[%s3] sm:$0x1]
      %v324 = vlaneseq
      %v325 = vshrl.u32 %v324, 7
      %v326 = vsub.s32 0, %v325
      %v327 = vrot.slane %v322, %v326
      %v361 = vunpack.c.l.b16 %v282
      %v362 = vunpack.c.l.b16 %v283
      %v363 = vunpack.c.l.b16 %v284
      %v364 = vunpack.c.l.b16 %v285
      %v365 = vunpack.c.l.b16 %v286
      %v366 = vunpack.c.l.b16 %v287
      %v367 = vunpack.c.l.b16 %v288
      %v368 = vunpack.c.l.b16 %v289
      %v369 = vunpack.c.l.b16 %v290
      %v370 = vunpack.c.l.b16 %v291
      %v371 = vunpack.c.l.b16 %v292
      %v372 = vunpack.c.l.b16 %v293
      %v373 = vunpack.c.l.b16 %v294
      %v374 = vunpack.c.l.b16 %v295
      %v375 = vunpack.c.l.b16 %v296
      %v376 = vunpack.c.l.b16 %v297
      %v377 = vunpack.c.l.b16 %v298
      %v378 = vunpack.c.l.b16 %v299
      %v379 = vunpack.c.l.b16 %v300
      %v380 = vunpack.c.l.b16 %v301
      %v381 = vunpack.c.l.b16 %v302
      %v382 = vunpack.c.l.b16 %v303
      %v383 = vunpack.c.l.b16 %v304
      %v384 = vunpack.c.l.b16 %v305
      %v385 = vunpack.c.l.b16 %v306
      %v386 = vunpack.c.l.b16 %v307
      %v387 = vunpack.c.l.b16 %v308
      %v388 = vunpack.c.l.b16 %v309
      %v389 = vunpack.c.l.b16 %v310
      %v390 = vunpack.c.l.b16 %v311
      %v391 = vunpack.c.l.b16 %v312
      %v392 = vunpack.c.l.b16 %v313
      %v393 = vpack.c.b16 %v362, %v361
      %v394 = vpack.c.b16 %v364, %v363
      %v395 = vpack.c.b16 %v366, %v365
      %v396 = vpack.c.b16 %v368, %v367
      %v397 = vpack.c.b16 %v370, %v369
      %v398 = vpack.c.b16 %v372, %v371
      %v399 = vpack.c.b16 %v374, %v373
      %v400 = vpack.c.b16 %v376, %v375
      %v401 = vpack.c.b16 %v378, %v377
      %v402 = vpack.c.b16 %v380, %v379
      %v403 = vpack.c.b16 %v382, %v381
      %v404 = vpack.c.b16 %v384, %v383
      %v405 = vpack.c.b16 %v386, %v385
      %v406 = vpack.c.b16 %v388, %v387
      %v407 = vpack.c.b16 %v390, %v389
      %v408 = vpack.c.b16 %v392, %v391
      %v417 = vunpack.c.l.b16 %v314
      %v418 = vunpack.c.l.b16 %v315
      %v419 = vunpack.c.l.b16 %v316
      %v420 = vunpack.c.l.b16 %v317
      %v421 = vunpack.c.l.b16 %v318
      %v422 = vunpack.c.l.b16 %v319
      %v423 = vunpack.c.l.b16 %v320
      %v424 = vunpack.c.l.b16 %v321
      %v425 = vpack.c.b16 %v418, %v417
      %v426 = vpack.c.b16 %v420, %v419
      %v427 = vpack.c.b16 %v422, %v421
      %v428 = vpack.c.b16 %v424, %v423
      %vm433 = vcmask 523264
      %v435 = vsel %vm433, %v393, 0
      %v438 = vsel %vm433, %v394, 0
      %v441 = vsel %vm433, %v395, 0
      %v444 = vsel %vm433, %v396, 0
      %v447 = vsel %vm433, %v397, 0
      %v450 = vsel %vm433, %v398, 0
      %v453 = vsel %vm433, %v399, 0
      %v456 = vsel %vm433, %v400, 0
      %v459 = vsel %vm433, %v401, 0
      %v462 = vsel %vm433, %v402, 0
      %v465 = vsel %vm433, %v403, 0
      %v468 = vsel %vm433, %v404, 0
      %v471 = vsel %vm433, %v405, 0
      %v474 = vsel %vm433, %v406, 0
      %v477 = vsel %vm433, %v407, 0
      %v480 = vsel %vm433, %v408, 0
      %482 = vmatprep.subr.bf16.mxu0 0
      %483 = vmatpush1.bf16.msra.mxu0 %v425
      %484 = vmatprep.subr.bf16.mxu0 0
      %485 = vmatpush1.bf16.msra.mxu0 %v426
      %486 = vmatprep.subr.bf16.mxu0 0
      %487 = vmatpush1.bf16.msra.mxu0 %v427
      %488 = vmatprep.subr.bf16.mxu0 0
      %489 = vmatpush1.bf16.msra.mxu0 %v428
      %490 = vmatprep.subr.bf16.mxu0 0
      %491 = vmatpush1.bf16.msra.mxu0 0
      %492 = vmatprep.subr.bf16.mxu0 0
      %493 = vmatpush1.bf16.msra.mxu0 0
      %494 = vmatprep.subr.bf16.mxu0 0
      %495 = vmatpush1.bf16.msra.mxu0 0
      %496 = vmatprep.subr.bf16.mxu0 0
      %497 = vmatpush1.bf16.msra.mxu0 0
      %498 = vmatprep.subr.bf16.mxu0 0
      %499 = vmatpush1.bf16.msra.mxu0 0
      %500 = vmatprep.subr.bf16.mxu0 0
      %501 = vmatpush1.bf16.msra.mxu0 0
      %502 = vmatprep.subr.bf16.mxu0 0
      %503 = vmatpush1.bf16.msra.mxu0 0
      %504 = vmatprep.subr.bf16.mxu0 0
      %505 = vmatpush1.bf16.msra.mxu0 0
      %506 = vmatprep.subr.bf16.mxu0 0
      %507 = vmatpush1.bf16.msra.mxu0 0
      %508 = vmatprep.subr.bf16.mxu0 0
      %509 = vmatpush1.bf16.msra.mxu0 0
      %510 = vmatprep.subr.bf16.mxu0 0
      %511 = vmatpush1.bf16.msra.mxu0 0
      %512 = vmatprep.subr.bf16.mxu0 0
      %513 = vmatpush1.bf16.msra.mxu0 0
      %514 = vmatprep.mubr.bf16.mxu0 0
      %515 = vmatmul.mubr.bf16.gmra.mrb[0].mxu0 %v435
      %v516 = vpop.f32.mrb[0].mxu0
      %v517 = vadd.f32 %v327, %v516
      %v518 = vpop.f32.mrb[0].mxu0
      %v519 = vpop.f32.mrb[0].mxu0
      %v520 = vadd.f32 %v327, %v519
      %v521 = vpop.f32.mrb[0].mxu0
      %522 = vmatprep.mubr.bf16.mxu0 0
      %523 = vmatmul.mubr.bf16.gmra.mrb[0].mxu0 %v438
      %v524 = vpop.f32.mrb[0].mxu0
      %v525 = vadd.f32 %v327, %v524
      %v526 = vpop.f32.mrb[0].mxu0
      %v527 = vpop.f32.mrb[0].mxu0
      %v528 = vadd.f32 %v327, %v527
      %v529 = vpop.f32.mrb[0].mxu0
      %530 = vmatprep.mubr.bf16.mxu0 0
      %531 = vmatmul.mubr.bf16.gmra.mrb[0].mxu0 %v441
      %v532 = vpop.f32.mrb[0].mxu0
      %v533 = vadd.f32 %v327, %v532
      %v534 = vpop.f32.mrb[0].mxu0
      %v535 = vpop.f32.mrb[0].mxu0
      %v536 = vadd.f32 %v327, %v535
      %v537 = vpop.f32.mrb[0].mxu0
      %538 = vmatprep.mubr.bf16.mxu0 0
      %539 = vmatmul.mubr.bf16.gmra.mrb[0].mxu0 %v444
      %v540 = vpop.f32.mrb[0].mxu0
      %v541 = vadd.f32 %v327, %v540
      %v542 = vpop.f32.mrb[0].mxu0
      %v543 = vpop.f32.mrb[0].mxu0
      %v544 = vadd.f32 %v327, %v543
      %v545 = vpop.f32.mrb[0].mxu0
      %546 = vmatprep.mubr.bf16.mxu0 0
      %547 = vmatmul.mubr.bf16.gmra.mrb[0].mxu0 %v447
      %v548 = vpop.f32.mrb[0].mxu0
      %v549 = vadd.f32 %v327, %v548
      %v550 = vpop.f32.mrb[0].mxu0
      %v551 = vpop.f32.mrb[0].mxu0
      %v552 = vadd.f32 %v327, %v551
      %v553 = vpop.f32.mrb[0].mxu0
      %554 = vmatprep.mubr.bf16.mxu0 0
      %555 = vmatmul.mubr.bf16.gmra.mrb[0].mxu0 %v450
      %v556 = vpop.f32.mrb[0].mxu0
      %v557 = vadd.f32 %v327, %v556
      %v558 = vpop.f32.mrb[0].mxu0
      %v559 = vpop.f32.mrb[0].mxu0
      %v560 = vadd.f32 %v327, %v559
      %v561 = vpop.f32.mrb[0].mxu0
      %562 = vmatprep.mubr.bf16.mxu0 0
      %563 = vmatmul.mubr.bf16.gmra.mrb[0].mxu0 %v453
      %v564 = vpop.f32.mrb[0].mxu0
      %v565 = vadd.f32 %v327, %v564
      %v566 = vpop.f32.mrb[0].mxu0
      %v567 = vpop.f32.mrb[0].mxu0
      %v568 = vadd.f32 %v327, %v567
      %v569 = vpop.f32.mrb[0].mxu0
      %570 = vmatprep.mubr.bf16.mxu0 0
      %571 = vmatmul.mubr.bf16.gmra.mrb[0].mxu0 %v456
      %v572 = vpop.f32.mrb[0].mxu0
      %v573 = vadd.f32 %v327, %v572
      %v574 = vpop.f32.mrb[0].mxu0
      %v575 = vpop.f32.mrb[0].mxu0
      %v576 = vadd.f32 %v327, %v575
      %v577 = vpop.f32.mrb[0].mxu0
      %578 = vmatprep.mubr.bf16.mxu0 0
      %579 = vmatmul.mubr.bf16.gmra.mrb[0].mxu0 %v459
      %v580 = vpop.f32.mrb[0].mxu0
      %v581 = vadd.f32 %v327, %v580
      %v582 = vpop.f32.mrb[0].mxu0
      %v583 = vpop.f32.mrb[0].mxu0
      %v584 = vadd.f32 %v327, %v583
      %v585 = vpop.f32.mrb[0].mxu0
      %586 = vmatprep.mubr.bf16.mxu0 0
      %587 = vmatmul.mubr.bf16.gmra.mrb[0].mxu0 %v462
      %v588 = vpop.f32.mrb[0].mxu0
      %v589 = vadd.f32 %v327, %v588
      %v590 = vpop.f32.mrb[0].mxu0
      %v591 = vpop.f32.mrb[0].mxu0
      %v592 = vadd.f32 %v327, %v591
      %v593 = vpop.f32.mrb[0].mxu0
      %594 = vmatprep.mubr.bf16.mxu0 0
      %595 = vmatmul.mubr.bf16.gmra.mrb[0].mxu0 %v465
      %v596 = vpop.f32.mrb[0].mxu0
      %v597 = vadd.f32 %v327, %v596
      %v598 = vpop.f32.mrb[0].mxu0
      %v599 = vpop.f32.mrb[0].mxu0
      %v600 = vadd.f32 %v327, %v599
      %v601 = vpop.f32.mrb[0].mxu0
      %602 = vmatprep.mubr.bf16.mxu0 0
      %603 = vmatmul.mubr.bf16.gmra.mrb[0].mxu0 %v468
      %v604 = vpop.f32.mrb[0].mxu0
      %v605 = vadd.f32 %v327, %v604
      %v606 = vpop.f32.mrb[0].mxu0
      %v607 = vpop.f32.mrb[0].mxu0
      %v608 = vadd.f32 %v327, %v607
      %v609 = vpop.f32.mrb[0].mxu0
      %610 = vmatprep.mubr.bf16.mxu0 0
      %611 = vmatmul.mubr.bf16.gmra.mrb[0].mxu0 %v471
      %v612 = vpop.f32.mrb[0].mxu0
      %v613 = vadd.f32 %v327, %v612
      %v614 = vpop.f32.mrb[0].mxu0
      %v615 = vpop.f32.mrb[0].mxu0
      %v616 = vadd.f32 %v327, %v615
      %v617 = vpop.f32.mrb[0].mxu0
      %618 = vmatprep.mubr.bf16.mxu0 0
      %619 = vmatmul.mubr.bf16.gmra.mrb[0].mxu0 %v474
      %v620 = vpop.f32.mrb[0].mxu0
      %v621 = vadd.f32 %v327, %v620
      %v622 = vpop.f32.mrb[0].mxu0
      %v623 = vpop.f32.mrb[0].mxu0
      %v624 = vadd.f32 %v327, %v623
      %v625 = vpop.f32.mrb[0].mxu0
      %626 = vmatprep.mubr.bf16.mxu0 0
      %627 = vmatmul.mubr.bf16.gmra.mrb[0].mxu0 %v477
      %v628 = vpop.f32.mrb[0].mxu0
      %v629 = vadd.f32 %v327, %v628
      %v630 = vpop.f32.mrb[0].mxu0
      %v631 = vpop.f32.mrb[0].mxu0
      %v632 = vadd.f32 %v327, %v631
      %v633 = vpop.f32.mrb[0].mxu0
      %634 = vmatprep.mubr.bf16.mxu0 0
      %635 = vmatmul.mubr.bf16.gmra.mrb[0].mxu0 %v480
      %v636 = vpop.f32.mrb[0].mxu0
      %v637 = vadd.f32 %v327, %v636
      %v638 = vpop.f32.mrb[0].mxu0
      %v639 = vpop.f32.mrb[0].mxu0
      %v640 = vadd.f32 %v327, %v639
      %v641 = vpop.f32.mrb[0].mxu0
      %642 = vdwg.mxu0
      %v643 = vld [vmem:[%s257] sm:$0xff]
      %v644 = vld [vmem:[%s257 + $0x8] sm:$0xff]
      %v645 = vld [vmem:[%s257 + $0x10] sm:$0xff]
      %v646 = vld [vmem:[%s257 + $0x18] sm:$0xff]
      %v647 = vld [vmem:[%s257 + $0x20] sm:$0xff]
      %v648 = vld [vmem:[%s257 + $0x28] sm:$0xff]
      %v649 = vld [vmem:[%s257 + $0x30] sm:$0xff]
      %v650 = vld [vmem:[%s257 + $0x38] sm:$0xff]
      %v651 = vld [vmem:[%s257 + $0x40] sm:$0xff]
      %v652 = vld [vmem:[%s257 + $0x48] sm:$0xff]
      %v653 = vld [vmem:[%s257 + $0x50] sm:$0xff]
      %v654 = vld [vmem:[%s257 + $0x58] sm:$0xff]
      %v655 = vld [vmem:[%s257 + $0x60] sm:$0xff]
      %v656 = vld [vmem:[%s257 + $0x68] sm:$0xff]
      %v657 = vld [vmem:[%s257 + $0x70] sm:$0xff]
      %v658 = vld [vmem:[%s257 + $0x78] sm:$0xff]
      %v659 = vld [vmem:[%s257 + $0x80] sm:$0xff]
      %v660 = vld [vmem:[%s257 + $0x88] sm:$0xff]
      %v661 = vld [vmem:[%s257 + $0x90] sm:$0xff]
      %v662 = vld [vmem:[%s257 + $0x98] sm:$0xff]
      %v663 = vld [vmem:[%s257 + $0xa0] sm:$0xff]
      %v664 = vld [vmem:[%s257 + $0xa8] sm:$0xff]
      %v665 = vld [vmem:[%s257 + $0xb0] sm:$0xff]
      %v666 = vld [vmem:[%s257 + $0xb8] sm:$0xff]
      %v667 = vld [vmem:[%s257 + $0xc0] sm:$0xff]
      %v668 = vld [vmem:[%s257 + $0xc8] sm:$0xff]
      %v669 = vld [vmem:[%s257 + $0xd0] sm:$0xff]
      %v670 = vld [vmem:[%s257 + $0xd8] sm:$0xff]
      %v671 = vld [vmem:[%s257 + $0xe0] sm:$0xff]
      %v672 = vld [vmem:[%s257 + $0xe8] sm:$0xff]
      %v673 = vld [vmem:[%s257 + $0xf0] sm:$0xff]
      %v674 = vld [vmem:[%s257 + $0xf8] sm:$0xff]
      %v675 = vld [vmem:[%s257 + $0x100] sm:$0xff]
      %v676 = vld [vmem:[%s257 + $0x108] sm:$0xff]
      %v677 = vld [vmem:[%s257 + $0x110] sm:$0xff]
      %v678 = vld [vmem:[%s257 + $0x118] sm:$0xff]
      %v679 = vld [vmem:[%s257 + $0x120] sm:$0xff]
      %v680 = vld [vmem:[%s257 + $0x128] sm:$0xff]
      %v681 = vld [vmem:[%s257 + $0x130] sm:$0xff]
      %v682 = vld [vmem:[%s257 + $0x138] sm:$0xff]
      %v683 = vld [vmem:[%s257 + $0x140] sm:$0xff]
      %v684 = vld [vmem:[%s257 + $0x148] sm:$0xff]
      %v685 = vld [vmem:[%s257 + $0x150] sm:$0xff]
      %v686 = vld [vmem:[%s257 + $0x158] sm:$0xff]
      %v687 = vld [vmem:[%s257 + $0x160] sm:$0xff]
      %v688 = vld [vmem:[%s257 + $0x168] sm:$0xff]
      %v689 = vld [vmem:[%s257 + $0x170] sm:$0xff]
      %v690 = vld [vmem:[%s257 + $0x178] sm:$0xff]
      %v691 = vld [vmem:[%s257 + $0x180] sm:$0xff]
      %v692 = vld [vmem:[%s257 + $0x188] sm:$0xff]
      %v693 = vld [vmem:[%s257 + $0x190] sm:$0xff]
      %v694 = vld [vmem:[%s257 + $0x198] sm:$0xff]
      %v695 = vld [vmem:[%s257 + $0x1a0] sm:$0xff]
      %v696 = vld [vmem:[%s257 + $0x1a8] sm:$0xff]
      %v697 = vld [vmem:[%s257 + $0x1b0] sm:$0xff]
      %v698 = vld [vmem:[%s257 + $0x1b8] sm:$0xff]
      %v699 = vld [vmem:[%s257 + $0x1c0] sm:$0xff]
      %v700 = vld [vmem:[%s257 + $0x1c8] sm:$0xff]
      %v701 = vld [vmem:[%s257 + $0x1d0] sm:$0xff]
      %v702 = vld [vmem:[%s257 + $0x1d8] sm:$0xff]
      %v703 = vld [vmem:[%s257 + $0x1e0] sm:$0xff]
      %v704 = vld [vmem:[%s257 + $0x1e8] sm:$0xff]
      %v705 = vld [vmem:[%s257 + $0x1f0] sm:$0xff]
      %v706 = vld [vmem:[%s257 + $0x1f8] sm:$0xff]
      %vm707 = vcmask 261120
      %708 = vst.msk [vmem:[%s279] sm:$0xff] %vm707, %v643
      %709 = vst.msk [vmem:[%s279 + $0x8] sm:$0xff] %vm707, %v644
      %710 = vst.msk [vmem:[%s279 + $0x10] sm:$0xff] %vm707, %v645
      %711 = vst.msk [vmem:[%s279 + $0x18] sm:$0xff] %vm707, %v646
      %712 = vst.msk [vmem:[%s279 + $0x20] sm:$0xff] %vm707, %v647
      %713 = vst.msk [vmem:[%s279 + $0x28] sm:$0xff] %vm707, %v648
      %714 = vst.msk [vmem:[%s279 + $0x30] sm:$0xff] %vm707, %v649
      %715 = vst.msk [vmem:[%s279 + $0x38] sm:$0xff] %vm707, %v650
      %716 = vst.msk [vmem:[%s279 + $0x40] sm:$0xff] %vm707, %v651
      %717 = vst.msk [vmem:[%s279 + $0x48] sm:$0xff] %vm707, %v652
      %718 = vst.msk [vmem:[%s279 + $0x50] sm:$0xff] %vm707, %v653
      %719 = vst.msk [vmem:[%s279 + $0x58] sm:$0xff] %vm707, %v654
      %720 = vst.msk [vmem:[%s279 + $0x60] sm:$0xff] %vm707, %v655
      %721 = vst.msk [vmem:[%s279 + $0x68] sm:$0xff] %vm707, %v656
      %722 = vst.msk [vmem:[%s279 + $0x70] sm:$0xff] %vm707, %v657
      %723 = vst.msk [vmem:[%s279 + $0x78] sm:$0xff] %vm707, %v658
      %724 = vst.msk [vmem:[%s279 + $0x80] sm:$0xff] %vm707, %v659
      %725 = vst.msk [vmem:[%s279 + $0x88] sm:$0xff] %vm707, %v660
      %726 = vst.msk [vmem:[%s279 + $0x90] sm:$0xff] %vm707, %v661
      %727 = vst.msk [vmem:[%s279 + $0x98] sm:$0xff] %vm707, %v662
      %728 = vst.msk [vmem:[%s279 + $0xa0] sm:$0xff] %vm707, %v663
      %729 = vst.msk [vmem:[%s279 + $0xa8] sm:$0xff] %vm707, %v664
      %730 = vst.msk [vmem:[%s279 + $0xb0] sm:$0xff] %vm707, %v665
      %731 = vst.msk [vmem:[%s279 + $0xb8] sm:$0xff] %vm707, %v666
      %732 = vst.msk [vmem:[%s279 + $0xc0] sm:$0xff] %vm707, %v667
      %733 = vst.msk [vmem:[%s279 + $0xc8] sm:$0xff] %vm707, %v668
      %734 = vst.msk [vmem:[%s279 + $0xd0] sm:$0xff] %vm707, %v669
      %735 = vst.msk [vmem:[%s279 + $0xd8] sm:$0xff] %vm707, %v670
      %736 = vst.msk [vmem:[%s279 + $0xe0] sm:$0xff] %vm707, %v671
      %737 = vst.msk [vmem:[%s279 + $0xe8] sm:$0xff] %vm707, %v672
      %738 = vst.msk [vmem:[%s279 + $0xf0] sm:$0xff] %vm707, %v673
      %739 = vst.msk [vmem:[%s279 + $0xf8] sm:$0xff] %vm707, %v674
      %740 = vst.msk [vmem:[%s279 + $0x100] sm:$0xff] %vm707, %v675
      %741 = vst.msk [vmem:[%s279 + $0x108] sm:$0xff] %vm707, %v676
      %742 = vst.msk [vmem:[%s279 + $0x110] sm:$0xff] %vm707, %v677
      %743 = vst.msk [vmem:[%s279 + $0x118] sm:$0xff] %vm707, %v678
      %744 = vst.msk [vmem:[%s279 + $0x120] sm:$0xff] %vm707, %v679
      %745 = vst.msk [vmem:[%s279 + $0x128] sm:$0xff] %vm707, %v680
      %746 = vst.msk [vmem:[%s279 + $0x130] sm:$0xff] %vm707, %v681
      %747 = vst.msk [vmem:[%s279 + $0x138] sm:$0xff] %vm707, %v682
      %748 = vst.msk [vmem:[%s279 + $0x140] sm:$0xff] %vm707, %v683
      %749 = vst.msk [vmem:[%s279 + $0x148] sm:$0xff] %vm707, %v684
      %750 = vst.msk [vmem:[%s279 + $0x150] sm:$0xff] %vm707, %v685
      %751 = vst.msk [vmem:[%s279 + $0x158] sm:$0xff] %vm707, %v686
      %752 = vst.msk [vmem:[%s279 + $0x160] sm:$0xff] %vm707, %v687
      %753 = vst.msk [vmem:[%s279 + $0x168] sm:$0xff] %vm707, %v688
      %754 = vst.msk [vmem:[%s279 + $0x170] sm:$0xff] %vm707, %v689
      %755 = vst.msk [vmem:[%s279 + $0x178] sm:$0xff] %vm707, %v690
      %756 = vst.msk [vmem:[%s279 + $0x180] sm:$0xff] %vm707, %v691
      %757 = vst.msk [vmem:[%s279 + $0x188] sm:$0xff] %vm707, %v692
      %758 = vst.msk [vmem:[%s279 + $0x190] sm:$0xff] %vm707, %v693
      %759 = vst.msk [vmem:[%s279 + $0x198] sm:$0xff] %vm707, %v694
      %760 = vst.msk [vmem:[%s279 + $0x1a0] sm:$0xff] %vm707, %v695
      %761 = vst.msk [vmem:[%s279 + $0x1a8] sm:$0xff] %vm707, %v696
      %762 = vst.msk [vmem:[%s279 + $0x1b0] sm:$0xff] %vm707, %v697
      %763 = vst.msk [vmem:[%s279 + $0x1b8] sm:$0xff] %vm707, %v698
      %764 = vst.msk [vmem:[%s279 + $0x1c0] sm:$0xff] %vm707, %v699
      %765 = vst.msk [vmem:[%s279 + $0x1c8] sm:$0xff] %vm707, %v700
      %766 = vst.msk [vmem:[%s279 + $0x1d0] sm:$0xff] %vm707, %v701
      %767 = vst.msk [vmem:[%s279 + $0x1d8] sm:$0xff] %vm707, %v702
      %768 = vst.msk [vmem:[%s279 + $0x1e0] sm:$0xff] %vm707, %v703
      %769 = vst.msk [vmem:[%s279 + $0x1e8] sm:$0xff] %vm707, %v704
      %770 = vst.msk [vmem:[%s279 + $0x1f0] sm:$0xff] %vm707, %v705
      %771 = vst.msk [vmem:[%s279 + $0x1f8] sm:$0xff] %vm707, %v706
      %v772 = vld [vmem:[%s257] sm:$0xff]
      %v773 = vld [vmem:[%s257 + $0x8] sm:$0xff]
      %v774 = vld [vmem:[%s257 + $0x10] sm:$0xff]
      %v775 = vld [vmem:[%s257 + $0x18] sm:$0xff]
      %v776 = vld [vmem:[%s257 + $0x20] sm:$0xff]
      %v777 = vld [vmem:[%s257 + $0x28] sm:$0xff]
      %v778 = vld [vmem:[%s257 + $0x30] sm:$0xff]
      %v779 = vld [vmem:[%s257 + $0x38] sm:$0xff]
      %v780 = vld [vmem:[%s257 + $0x40] sm:$0xff]
      %v781 = vld [vmem:[%s257 + $0x48] sm:$0xff]
      %v782 = vld [vmem:[%s257 + $0x50] sm:$0xff]
      %v783 = vld [vmem:[%s257 + $0x58] sm:$0xff]
      %v784 = vld [vmem:[%s257 + $0x60] sm:$0xff]
      %v785 = vld [vmem:[%s257 + $0x68] sm:$0xff]
      %v786 = vld [vmem:[%s257 + $0x70] sm:$0xff]
      %v787 = vld [vmem:[%s257 + $0x78] sm:$0xff]
      %v788 = vld [vmem:[%s257 + $0x80] sm:$0xff]
      %v789 = vld [vmem:[%s257 + $0x88] sm:$0xff]
      %v790 = vld [vmem:[%s257 + $0x90] sm:$0xff]
      %v791 = vld [vmem:[%s257 + $0x98] sm:$0xff]
      %v792 = vld [vmem:[%s257 + $0xa0] sm:$0xff]
      %v793 = vld [vmem:[%s257 + $0xa8] sm:$0xff]
      %v794 = vld [vmem:[%s257 + $0xb0] sm:$0xff]
      %v795 = vld [vmem:[%s257 + $0xb8] sm:$0xff]
      %v796 = vld [vmem:[%s257 + $0xc0] sm:$0xff]
      %v797 = vld [vmem:[%s257 + $0xc8] sm:$0xff]
      %v798 = vld [vmem:[%s257 + $0xd0] sm:$0xff]
      %v799 = vld [vmem:[%s257 + $0xd8] sm:$0xff]
      %v800 = vld [vmem:[%s257 + $0xe0] sm:$0xff]
      %v801 = vld [vmem:[%s257 + $0xe8] sm:$0xff]
      %v802 = vld [vmem:[%s257 + $0xf0] sm:$0xff]
      %v803 = vld [vmem:[%s257 + $0xf8] sm:$0xff]
      %v804 = vld [vmem:[%s257 + $0x100] sm:$0xff]
      %v805 = vld [vmem:[%s257 + $0x108] sm:$0xff]
      %v806 = vld [vmem:[%s257 + $0x110] sm:$0xff]
      %v807 = vld [vmem:[%s257 + $0x118] sm:$0xff]
      %v808 = vld [vmem:[%s257 + $0x120] sm:$0xff]
      %v809 = vld [vmem:[%s257 + $0x128] sm:$0xff]
      %v810 = vld [vmem:[%s257 + $0x130] sm:$0xff]
      %v811 = vld [vmem:[%s257 + $0x138] sm:$0xff]
      %v812 = vld [vmem:[%s257 + $0x140] sm:$0xff]
      %v813 = vld [vmem:[%s257 + $0x148] sm:$0xff]
      %v814 = vld [vmem:[%s257 + $0x150] sm:$0xff]
      %v815 = vld [vmem:[%s257 + $0x158] sm:$0xff]
      %v816 = vld [vmem:[%s257 + $0x160] sm:$0xff]
      %v817 = vld [vmem:[%s257 + $0x168] sm:$0xff]
      %v818 = vld [vmem:[%s257 + $0x170] sm:$0xff]
      %v819 = vld [vmem:[%s257 + $0x178] sm:$0xff]
      %v820 = vld [vmem:[%s257 + $0x180] sm:$0xff]
      %v821 = vld [vmem:[%s257 + $0x188] sm:$0xff]
      %v822 = vld [vmem:[%s257 + $0x190] sm:$0xff]
      %v823 = vld [vmem:[%s257 + $0x198] sm:$0xff]
      %v824 = vld [vmem:[%s257 + $0x1a0] sm:$0xff]
      %v825 = vld [vmem:[%s257 + $0x1a8] sm:$0xff]
      %v826 = vld [vmem:[%s257 + $0x1b0] sm:$0xff]
      %v827 = vld [vmem:[%s257 + $0x1b8] sm:$0xff]
      %v828 = vld [vmem:[%s257 + $0x1c0] sm:$0xff]
      %v829 = vld [vmem:[%s257 + $0x1c8] sm:$0xff]
      %v830 = vld [vmem:[%s257 + $0x1d0] sm:$0xff]
      %v831 = vld [vmem:[%s257 + $0x1d8] sm:$0xff]
      %v832 = vld [vmem:[%s257 + $0x1e0] sm:$0xff]
      %v833 = vld [vmem:[%s257 + $0x1e8] sm:$0xff]
      %v834 = vld [vmem:[%s257 + $0x1f0] sm:$0xff]
      %v835 = vld [vmem:[%s257 + $0x1f8] sm:$0xff]
      %900 = vrot.lane.b32.xlu0 %v772, 32
      %v901 = vpop.permute.xlu0 %900
      %902 = vrot.lane.b32.xlu0 %v773, 32
      %v903 = vpop.permute.xlu0 %902
      %904 = vrot.lane.b32.xlu0 %v774, 32
      %v905 = vpop.permute.xlu0 %904
      %906 = vrot.lane.b32.xlu0 %v775, 32
      %v907 = vpop.permute.xlu0 %906
      %908 = vrot.lane.b32.xlu0 %v776, 32
      %v909 = vpop.permute.xlu0 %908
      %910 = vrot.lane.b32.xlu0 %v777, 32
      %v911 = vpop.permute.xlu0 %910
      %912 = vrot.lane.b32.xlu0 %v778, 32
      %v913 = vpop.permute.xlu0 %912
      %914 = vrot.lane.b32.xlu0 %v779, 32
      %v915 = vpop.permute.xlu0 %914
      %916 = vrot.lane.b32.xlu0 %v780, 32
      %v917 = vpop.permute.xlu0 %916
      %918 = vrot.lane.b32.xlu0 %v781, 32
      %v919 = vpop.permute.xlu0 %918
      %920 = vrot.lane.b32.xlu0 %v782, 32
      %v921 = vpop.permute.xlu0 %920
      %922 = vrot.lane.b32.xlu0 %v783, 32
      %v923 = vpop.permute.xlu0 %922
      %924 = vrot.lane.b32.xlu0 %v784, 32
      %v925 = vpop.permute.xlu0 %924
      %926 = vrot.lane.b32.xlu0 %v785, 32
      %v927 = vpop.permute.xlu0 %926
      %928 = vrot.lane.b32.xlu0 %v786, 32
      %v929 = vpop.permute.xlu0 %928
      %930 = vrot.lane.b32.xlu0 %v787, 32
      %v931 = vpop.permute.xlu0 %930
      %932 = vrot.lane.b32.xlu0 %v788, 32
      %v933 = vpop.permute.xlu0 %932
      %934 = vrot.lane.b32.xlu0 %v789, 32
      %v935 = vpop.permute.xlu0 %934
      %936 = vrot.lane.b32.xlu0 %v790, 32
      %v937 = vpop.permute.xlu0 %936
      %938 = vrot.lane.b32.xlu0 %v791, 32
      %v939 = vpop.permute.xlu0 %938
      %940 = vrot.lane.b32.xlu0 %v792, 32
      %v941 = vpop.permute.xlu0 %940
      %942 = vrot.lane.b32.xlu0 %v793, 32
      %v943 = vpop.permute.xlu0 %942
      %944 = vrot.lane.b32.xlu0 %v794, 32
      %v945 = vpop.permute.xlu0 %944
      %946 = vrot.lane.b32.xlu0 %v795, 32
      %v947 = vpop.permute.xlu0 %946
      %948 = vrot.lane.b32.xlu0 %v796, 32
      %v949 = vpop.permute.xlu0 %948
      %950 = vrot.lane.b32.xlu0 %v797, 32
      %v951 = vpop.permute.xlu0 %950
      %952 = vrot.lane.b32.xlu0 %v798, 32
      %v953 = vpop.permute.xlu0 %952
      %954 = vrot.lane.b32.xlu0 %v799, 32
      %v955 = vpop.permute.xlu0 %954
      %956 = vrot.lane.b32.xlu0 %v800, 32
      %v957 = vpop.permute.xlu0 %956
      %958 = vrot.lane.b32.xlu0 %v801, 32
      %v959 = vpop.permute.xlu0 %958
      %960 = vrot.lane.b32.xlu0 %v802, 32
      %v961 = vpop.permute.xlu0 %960
      %962 = vrot.lane.b32.xlu0 %v803, 32
      %v963 = vpop.permute.xlu0 %962
      %964 = vrot.lane.b32.xlu0 %v804, 32
      %v965 = vpop.permute.xlu0 %964
      %966 = vrot.lane.b32.xlu0 %v805, 32
      %v967 = vpop.permute.xlu0 %966
      %968 = vrot.lane.b32.xlu0 %v806, 32
      %v969 = vpop.permute.xlu0 %968
      %970 = vrot.lane.b32.xlu0 %v807, 32
      %v971 = vpop.permute.xlu0 %970
      %972 = vrot.lane.b32.xlu0 %v808, 32
      %v973 = vpop.permute.xlu0 %972
      %974 = vrot.lane.b32.xlu0 %v809, 32
      %v975 = vpop.permute.xlu0 %974
      %976 = vrot.lane.b32.xlu0 %v810, 32
      %v977 = vpop.permute.xlu0 %976
      %978 = vrot.lane.b32.xlu0 %v811, 32
      %v979 = vpop.permute.xlu0 %978
      %980 = vrot.lane.b32.xlu0 %v812, 32
      %v981 = vpop.permute.xlu0 %980
      %982 = vrot.lane.b32.xlu0 %v813, 32
      %v983 = vpop.permute.xlu0 %982
      %984 = vrot.lane.b32.xlu0 %v814, 32
      %v985 = vpop.permute.xlu0 %984
      %986 = vrot.lane.b32.xlu0 %v815, 32
      %v987 = vpop.permute.xlu0 %986
      %988 = vrot.lane.b32.xlu0 %v816, 32
      %v989 = vpop.permute.xlu0 %988
      %990 = vrot.lane.b32.xlu0 %v817, 32
      %v991 = vpop.permute.xlu0 %990
      %992 = vrot.lane.b32.xlu0 %v818, 32
      %v993 = vpop.permute.xlu0 %992
      %994 = vrot.lane.b32.xlu0 %v819, 32
      %v995 = vpop.permute.xlu0 %994
      %996 = vrot.lane.b32.xlu0 %v820, 32
      %v997 = vpop.permute.xlu0 %996
      %998 = vrot.lane.b32.xlu0 %v821, 32
      %v999 = vpop.permute.xlu0 %998
      %1000 = vrot.lane.b32.xlu0 %v822, 32
      %v1001 = vpop.permute.xlu0 %1000
      %1002 = vrot.lane.b32.xlu0 %v823, 32
      %v1003 = vpop.permute.xlu0 %1002
      %1004 = vrot.lane.b32.xlu0 %v824, 32
      %v1005 = vpop.permute.xlu0 %1004
      %1006 = vrot.lane.b32.xlu0 %v825, 32
      %v1007 = vpop.permute.xlu0 %1006
      %1008 = vrot.lane.b32.xlu0 %v826, 32
      %v1009 = vpop.permute.xlu0 %1008
      %1010 = vrot.lane.b32.xlu0 %v827, 32
      %v1011 = vpop.permute.xlu0 %1010
      %1012 = vrot.lane.b32.xlu0 %v828, 32
      %v1013 = vpop.permute.xlu0 %1012
      %1014 = vrot.lane.b32.xlu0 %v829, 32
      %v1015 = vpop.permute.xlu0 %1014
      %1016 = vrot.lane.b32.xlu0 %v830, 32
      %v1017 = vpop.permute.xlu0 %1016
      %1018 = vrot.lane.b32.xlu0 %v831, 32
      %v1019 = vpop.permute.xlu0 %1018
      %1020 = vrot.lane.b32.xlu0 %v832, 32
      %v1021 = vpop.permute.xlu0 %1020
      %1022 = vrot.lane.b32.xlu0 %v833, 32
      %v1023 = vpop.permute.xlu0 %1022
      %1024 = vrot.lane.b32.xlu0 %v834, 32
      %v1025 = vpop.permute.xlu0 %1024
      %1026 = vrot.lane.b32.xlu0 %v835, 32
      %v1027 = vpop.permute.xlu0 %1026
      %vm1092 = vcmask 785920
      %1093 = vst.msk [vmem:[%s279] sm:$0xff] %vm1092, %v901
      %1094 = vst.msk [vmem:[%s279 + $0x8] sm:$0xff] %vm1092, %v903
      %1095 = vst.msk [vmem:[%s279 + $0x10] sm:$0xff] %vm1092, %v905
      %1096 = vst.msk [vmem:[%s279 + $0x18] sm:$0xff] %vm1092, %v907
      %1097 = vst.msk [vmem:[%s279 + $0x20] sm:$0xff] %vm1092, %v909
      %1098 = vst.msk [vmem:[%s279 + $0x28] sm:$0xff] %vm1092, %v911
      %1099 = vst.msk [vmem:[%s279 + $0x30] sm:$0xff] %vm1092, %v913
      %1100 = vst.msk [vmem:[%s279 + $0x38] sm:$0xff] %vm1092, %v915
      %1101 = vst.msk [vmem:[%s279 + $0x40] sm:$0xff] %vm1092, %v917
      %1102 = vst.msk [vmem:[%s279 + $0x48] sm:$0xff] %vm1092, %v919
      %1103 = vst.msk [vmem:[%s279 + $0x50] sm:$0xff] %vm1092, %v921
      %1104 = vst.msk [vmem:[%s279 + $0x58] sm:$0xff] %vm1092, %v923
      %1105 = vst.msk [vmem:[%s279 + $0x60] sm:$0xff] %vm1092, %v925
      %1106 = vst.msk [vmem:[%s279 + $0x68] sm:$0xff] %vm1092, %v927
      %1107 = vst.msk [vmem:[%s279 + $0x70] sm:$0xff] %vm1092, %v929
      %1108 = vst.msk [vmem:[%s279 + $0x78] sm:$0xff] %vm1092, %v931
      %1109 = vst.msk [vmem:[%s279 + $0x80] sm:$0xff] %vm1092, %v933
      %1110 = vst.msk [vmem:[%s279 + $0x88] sm:$0xff] %vm1092, %v935
      %1111 = vst.msk [vmem:[%s279 + $0x90] sm:$0xff] %vm1092, %v937
      %1112 = vst.msk [vmem:[%s279 + $0x98] sm:$0xff] %vm1092, %v939
      %1113 = vst.msk [vmem:[%s279 + $0xa0] sm:$0xff] %vm1092, %v941
      %1114 = vst.msk [vmem:[%s279 + $0xa8] sm:$0xff] %vm1092, %v943
      %1115 = vst.msk [vmem:[%s279 + $0xb0] sm:$0xff] %vm1092, %v945
      %1116 = vst.msk [vmem:[%s279 + $0xb8] sm:$0xff] %vm1092, %v947
      %1117 = vst.msk [vmem:[%s279 + $0xc0] sm:$0xff] %vm1092, %v949
      %1118 = vst.msk [vmem:[%s279 + $0xc8] sm:$0xff] %vm1092, %v951
      %1119 = vst.msk [vmem:[%s279 + $0xd0] sm:$0xff] %vm1092, %v953
      %1120 = vst.msk [vmem:[%s279 + $0xd8] sm:$0xff] %vm1092, %v955
      %1121 = vst.msk [vmem:[%s279 + $0xe0] sm:$0xff] %vm1092, %v957
      %1122 = vst.msk [vmem:[%s279 + $0xe8] sm:$0xff] %vm1092, %v959
      %1123 = vst.msk [vmem:[%s279 + $0xf0] sm:$0xff] %vm1092, %v961
      %1124 = vst.msk [vmem:[%s279 + $0xf8] sm:$0xff] %vm1092, %v963
      %1125 = vst.msk [vmem:[%s279 + $0x100] sm:$0xff] %vm1092, %v965
      %1126 = vst.msk [vmem:[%s279 + $0x108] sm:$0xff] %vm1092, %v967
      %1127 = vst.msk [vmem:[%s279 + $0x110] sm:$0xff] %vm1092, %v969
      %1128 = vst.msk [vmem:[%s279 + $0x118] sm:$0xff] %vm1092, %v971
      %1129 = vst.msk [vmem:[%s279 + $0x120] sm:$0xff] %vm1092, %v973
      %1130 = vst.msk [vmem:[%s279 + $0x128] sm:$0xff] %vm1092, %v975
      %1131 = vst.msk [vmem:[%s279 + $0x130] sm:$0xff] %vm1092, %v977
      %1132 = vst.msk [vmem:[%s279 + $0x138] sm:$0xff] %vm1092, %v979
      %1133 = vst.msk [vmem:[%s279 + $0x140] sm:$0xff] %vm1092, %v981
      %1134 = vst.msk [vmem:[%s279 + $0x148] sm:$0xff] %vm1092, %v983
      %1135 = vst.msk [vmem:[%s279 + $0x150] sm:$0xff] %vm1092, %v985
      %1136 = vst.msk [vmem:[%s279 + $0x158] sm:$0xff] %vm1092, %v987
      %1137 = vst.msk [vmem:[%s279 + $0x160] sm:$0xff] %vm1092, %v989
      %1138 = vst.msk [vmem:[%s279 + $0x168] sm:$0xff] %vm1092, %v991
      %1139 = vst.msk [vmem:[%s279 + $0x170] sm:$0xff] %vm1092, %v993
      %1140 = vst.msk [vmem:[%s279 + $0x178] sm:$0xff] %vm1092, %v995
      %1141 = vst.msk [vmem:[%s279 + $0x180] sm:$0xff] %vm1092, %v997
      %1142 = vst.msk [vmem:[%s279 + $0x188] sm:$0xff] %vm1092, %v999
      %1143 = vst.msk [vmem:[%s279 + $0x190] sm:$0xff] %vm1092, %v1001
      %1144 = vst.msk [vmem:[%s279 + $0x198] sm:$0xff] %vm1092, %v1003
      %1145 = vst.msk [vmem:[%s279 + $0x1a0] sm:$0xff] %vm1092, %v1005
      %1146 = vst.msk [vmem:[%s279 + $0x1a8] sm:$0xff] %vm1092, %v1007
      %1147 = vst.msk [vmem:[%s279 + $0x1b0] sm:$0xff] %vm1092, %v1009
      %1148 = vst.msk [vmem:[%s279 + $0x1b8] sm:$0xff] %vm1092, %v1011
      %1149 = vst.msk [vmem:[%s279 + $0x1c0] sm:$0xff] %vm1092, %v1013
      %1150 = vst.msk [vmem:[%s279 + $0x1c8] sm:$0xff] %vm1092, %v1015
      %1151 = vst.msk [vmem:[%s279 + $0x1d0] sm:$0xff] %vm1092, %v1017
      %1152 = vst.msk [vmem:[%s279 + $0x1d8] sm:$0xff] %vm1092, %v1019
      %1153 = vst.msk [vmem:[%s279 + $0x1e0] sm:$0xff] %vm1092, %v1021
      %1154 = vst.msk [vmem:[%s279 + $0x1e8] sm:$0xff] %vm1092, %v1023
      %1155 = vst.msk [vmem:[%s279 + $0x1f0] sm:$0xff] %vm1092, %v1025
      %1156 = vst.msk [vmem:[%s279 + $0x1f8] sm:$0xff] %vm1092, %v1027
      %1189 = vrot.lane.b32.xlu0 %v517, 32
      %v1190 = vpop.permute.xlu0 %1189
      %1191 = vrot.lane.b32.xlu0 %v520, 32
      %v1192 = vpop.permute.xlu0 %1191
      %1193 = vrot.lane.b32.xlu0 %v525, 32
      %v1194 = vpop.permute.xlu0 %1193
      %1195 = vrot.lane.b32.xlu0 %v528, 32
      %v1196 = vpop.permute.xlu0 %1195
      %1197 = vrot.lane.b32.xlu0 %v533, 32
      %v1198 = vpop.permute.xlu0 %1197
      %1199 = vrot.lane.b32.xlu0 %v536, 32
      %v1200 = vpop.permute.xlu0 %1199
      %1201 = vrot.lane.b32.xlu0 %v541, 32
      %v1202 = vpop.permute.xlu0 %1201
      %1203 = vrot.lane.b32.xlu0 %v544, 32
      %v1204 = vpop.permute.xlu0 %1203
      %1205 = vrot.lane.b32.xlu0 %v549, 32
      %v1206 = vpop.permute.xlu0 %1205
      %1207 = vrot.lane.b32.xlu0 %v552, 32
      %v1208 = vpop.permute.xlu0 %1207
      %1209 = vrot.lane.b32.xlu0 %v557, 32
      %v1210 = vpop.permute.xlu0 %1209
      %1211 = vrot.lane.b32.xlu0 %v560, 32
      %v1212 = vpop.permute.xlu0 %1211
      %1213 = vrot.lane.b32.xlu0 %v565, 32
      %v1214 = vpop.permute.xlu0 %1213
      %1215 = vrot.lane.b32.xlu0 %v568, 32
      %v1216 = vpop.permute.xlu0 %1215
      %1217 = vrot.lane.b32.xlu0 %v573, 32
      %v1218 = vpop.permute.xlu0 %1217
      %1219 = vrot.lane.b32.xlu0 %v576, 32
      %v1220 = vpop.permute.xlu0 %1219
      %1221 = vrot.lane.b32.xlu0 %v581, 32
      %v1222 = vpop.permute.xlu0 %1221
      %1223 = vrot.lane.b32.xlu0 %v584, 32
      %v1224 = vpop.permute.xlu0 %1223
      %1225 = vrot.lane.b32.xlu0 %v589, 32
      %v1226 = vpop.permute.xlu0 %1225
      %1227 = vrot.lane.b32.xlu0 %v592, 32
      %v1228 = vpop.permute.xlu0 %1227
      %1229 = vrot.lane.b32.xlu0 %v597, 32
      %v1230 = vpop.permute.xlu0 %1229
      %1231 = vrot.lane.b32.xlu0 %v600, 32
      %v1232 = vpop.permute.xlu0 %1231
      %1233 = vrot.lane.b32.xlu0 %v605, 32
      %v1234 = vpop.permute.xlu0 %1233
      %1235 = vrot.lane.b32.xlu0 %v608, 32
      %v1236 = vpop.permute.xlu0 %1235
      %1237 = vrot.lane.b32.xlu0 %v613, 32
      %v1238 = vpop.permute.xlu0 %1237
      %1239 = vrot.lane.b32.xlu0 %v616, 32
      %v1240 = vpop.permute.xlu0 %1239
      %1241 = vrot.lane.b32.xlu0 %v621, 32
      %v1242 = vpop.permute.xlu0 %1241
      %1243 = vrot.lane.b32.xlu0 %v624, 32
      %v1244 = vpop.permute.xlu0 %1243
      %1245 = vrot.lane.b32.xlu0 %v629, 32
      %v1246 = vpop.permute.xlu0 %1245
      %1247 = vrot.lane.b32.xlu0 %v632, 32
      %v1248 = vpop.permute.xlu0 %1247
      %1249 = vrot.lane.b32.xlu0 %v637, 32
      %v1250 = vpop.permute.xlu0 %1249
      %1251 = vrot.lane.b32.xlu0 %v640, 32
      %v1252 = vpop.permute.xlu0 %1251
      %vm1285 = vcmask 523520
      %1286 = vst.msk [vmem:[%s279] sm:$0xff] %vm1285, %v1190
      %1287 = vst.msk [vmem:[%s279 + $0x8] sm:$0xff] %vm1285, %v1192
      %1288 = vst.msk [vmem:[%s279 + $0x20] sm:$0xff] %vm1285, %v1194
      %1289 = vst.msk [vmem:[%s279 + $0x28] sm:$0xff] %vm1285, %v1196
      %1290 = vst.msk [vmem:[%s279 + $0x40] sm:$0xff] %vm1285, %v1198
      %1291 = vst.msk [vmem:[%s279 + $0x48] sm:$0xff] %vm1285, %v1200
      %1292 = vst.msk [vmem:[%s279 + $0x60] sm:$0xff] %vm1285, %v1202
      %1293 = vst.msk [vmem:[%s279 + $0x68] sm:$0xff] %vm1285, %v1204
      %1294 = vst.msk [vmem:[%s279 + $0x80] sm:$0xff] %vm1285, %v1206
      %1295 = vst.msk [vmem:[%s279 + $0x88] sm:$0xff] %vm1285, %v1208
      %1296 = vst.msk [vmem:[%s279 + $0xa0] sm:$0xff] %vm1285, %v1210
      %1297 = vst.msk [vmem:[%s279 + $0xa8] sm:$0xff] %vm1285, %v1212
      %1298 = vst.msk [vmem:[%s279 + $0xc0] sm:$0xff] %vm1285, %v1214
      %1299 = vst.msk [vmem:[%s279 + $0xc8] sm:$0xff] %vm1285, %v1216
      %1300 = vst.msk [vmem:[%s279 + $0xe0] sm:$0xff] %vm1285, %v1218
      %1301 = vst.msk [vmem:[%s279 + $0xe8] sm:$0xff] %vm1285, %v1220
      %1302 = vst.msk [vmem:[%s279 + $0x100] sm:$0xff] %vm1285, %v1222
      %1303 = vst.msk [vmem:[%s279 + $0x108] sm:$0xff] %vm1285, %v1224
      %1304 = vst.msk [vmem:[%s279 + $0x120] sm:$0xff] %vm1285, %v1226
      %1305 = vst.msk [vmem:[%s279 + $0x128] sm:$0xff] %vm1285, %v1228
      %1306 = vst.msk [vmem:[%s279 + $0x140] sm:$0xff] %vm1285, %v1230
      %1307 = vst.msk [vmem:[%s279 + $0x148] sm:$0xff] %vm1285, %v1232
      %1308 = vst.msk [vmem:[%s279 + $0x160] sm:$0xff] %vm1285, %v1234
      %1309 = vst.msk [vmem:[%s279 + $0x168] sm:$0xff] %vm1285, %v1236
      %1310 = vst.msk [vmem:[%s279 + $0x180] sm:$0xff] %vm1285, %v1238
      %1311 = vst.msk [vmem:[%s279 + $0x188] sm:$0xff] %vm1285, %v1240
      %1312 = vst.msk [vmem:[%s279 + $0x1a0] sm:$0xff] %vm1285, %v1242
      %1313 = vst.msk [vmem:[%s279 + $0x1a8] sm:$0xff] %vm1285, %v1244
      %1314 = vst.msk [vmem:[%s279 + $0x1c0] sm:$0xff] %vm1285, %v1246
      %1315 = vst.msk [vmem:[%s279 + $0x1c8] sm:$0xff] %vm1285, %v1248
      %1316 = vst.msk [vmem:[%s279 + $0x1e0] sm:$0xff] %vm1285, %v1250
      %1317 = vst.msk [vmem:[%s279 + $0x1e8] sm:$0xff] %vm1285, %v1252
      %1318 = vrot.lane.b32.xlu0 %v517, 64
      %v1319 = vpop.permute.xlu0 %1318
      %1320 = vrot.lane.b32.xlu0 %v520, 64
      %v1321 = vpop.permute.xlu0 %1320
      %1322 = vrot.lane.b32.xlu0 %v525, 64
      %v1323 = vpop.permute.xlu0 %1322
      %1324 = vrot.lane.b32.xlu0 %v528, 64
      %v1325 = vpop.permute.xlu0 %1324
      %1326 = vrot.lane.b32.xlu0 %v533, 64
      %v1327 = vpop.permute.xlu0 %1326
      %1328 = vrot.lane.b32.xlu0 %v536, 64
      %v1329 = vpop.permute.xlu0 %1328
      %1330 = vrot.lane.b32.xlu0 %v541, 64
      %v1331 = vpop.permute.xlu0 %1330
      %1332 = vrot.lane.b32.xlu0 %v544, 64
      %v1333 = vpop.permute.xlu0 %1332
      %1334 = vrot.lane.b32.xlu0 %v549, 64
      %v1335 = vpop.permute.xlu0 %1334
      %1336 = vrot.lane.b32.xlu0 %v552, 64
      %v1337 = vpop.permute.xlu0 %1336
      %1338 = vrot.lane.b32.xlu0 %v557, 64
      %v1339 = vpop.permute.xlu0 %1338
      %1340 = vrot.lane.b32.xlu0 %v560, 64
      %v1341 = vpop.permute.xlu0 %1340
      %1342 = vrot.lane.b32.xlu0 %v565, 64
      %v1343 = vpop.permute.xlu0 %1342
      %1344 = vrot.lane.b32.xlu0 %v568, 64
      %v1345 = vpop.permute.xlu0 %1344
      %1346 = vrot.lane.b32.xlu0 %v573, 64
      %v1347 = vpop.permute.xlu0 %1346
      %1348 = vrot.lane.b32.xlu0 %v576, 64
      %v1349 = vpop.permute.xlu0 %1348
      %1350 = vrot.lane.b32.xlu0 %v581, 64
      %v1351 = vpop.permute.xlu0 %1350
      %1352 = vrot.lane.b32.xlu0 %v584, 64
      %v1353 = vpop.permute.xlu0 %1352
      %1354 = vrot.lane.b32.xlu0 %v589, 64
      %v1355 = vpop.permute.xlu0 %1354
      %1356 = vrot.lane.b32.xlu0 %v592, 64
      %v1357 = vpop.permute.xlu0 %1356
      %1358 = vrot.lane.b32.xlu0 %v597, 64
      %v1359 = vpop.permute.xlu0 %1358
      %1360 = vrot.lane.b32.xlu0 %v600, 64
      %v1361 = vpop.permute.xlu0 %1360
      %1362 = vrot.lane.b32.xlu0 %v605, 64
      %v1363 = vpop.permute.xlu0 %1362
      %1364 = vrot.lane.b32.xlu0 %v608, 64
      %v1365 = vpop.permute.xlu0 %1364
      %1366 = vrot.lane.b32.xlu0 %v613, 64
      %v1367 = vpop.permute.xlu0 %1366
      %1368 = vrot.lane.b32.xlu0 %v616, 64
      %v1369 = vpop.permute.xlu0 %1368
      %1370 = vrot.lane.b32.xlu0 %v621, 64
      %v1371 = vpop.permute.xlu0 %1370
      %1372 = vrot.lane.b32.xlu0 %v624, 64
      %v1373 = vpop.permute.xlu0 %1372
      %1374 = vrot.lane.b32.xlu0 %v629, 64
      %v1375 = vpop.permute.xlu0 %1374
      %1376 = vrot.lane.b32.xlu0 %v632, 64
      %v1377 = vpop.permute.xlu0 %1376
      %1378 = vrot.lane.b32.xlu0 %v637, 64
      %v1379 = vpop.permute.xlu0 %1378
      %1380 = vrot.lane.b32.xlu0 %v640, 64
      %v1381 = vpop.permute.xlu0 %1380
      %vm1414 = vcmask 1048320
      %1415 = vst.msk [vmem:[%s279] sm:$0xff] %vm1414, %v1319
      %1416 = vst.msk [vmem:[%s279 + $0x8] sm:$0xff] %vm1414, %v1321
      %1417 = vst.msk [vmem:[%s279 + $0x20] sm:$0xff] %vm1414, %v1323
      %1418 = vst.msk [vmem:[%s279 + $0x28] sm:$0xff] %vm1414, %v1325
      %1419 = vst.msk [vmem:[%s279 + $0x40] sm:$0xff] %vm1414, %v1327
      %1420 = vst.msk [vmem:[%s279 + $0x48] sm:$0xff] %vm1414, %v1329
      %1421 = vst.msk [vmem:[%s279 + $0x60] sm:$0xff] %vm1414, %v1331
      %1422 = vst.msk [vmem:[%s279 + $0x68] sm:$0xff] %vm1414, %v1333
      %1423 = vst.msk [vmem:[%s279 + $0x80] sm:$0xff] %vm1414, %v1335
      %1424 = vst.msk [vmem:[%s279 + $0x88] sm:$0xff] %vm1414, %v1337
      %1425 = vst.msk [vmem:[%s279 + $0xa0] sm:$0xff] %vm1414, %v1339
      %1426 = vst.msk [vmem:[%s279 + $0xa8] sm:$0xff] %vm1414, %v1341
      %1427 = vst.msk [vmem:[%s279 + $0xc0] sm:$0xff] %vm1414, %v1343
      %1428 = vst.msk [vmem:[%s279 + $0xc8] sm:$0xff] %vm1414, %v1345
      %1429 = vst.msk [vmem:[%s279 + $0xe0] sm:$0xff] %vm1414, %v1347
      %1430 = vst.msk [vmem:[%s279 + $0xe8] sm:$0xff] %vm1414, %v1349
      %1431 = vst.msk [vmem:[%s279 + $0x100] sm:$0xff] %vm1414, %v1351
      %1432 = vst.msk [vmem:[%s279 + $0x108] sm:$0xff] %vm1414, %v1353
      %1433 = vst.msk [vmem:[%s279 + $0x120] sm:$0xff] %vm1414, %v1355
      %1434 = vst.msk [vmem:[%s279 + $0x128] sm:$0xff] %vm1414, %v1357
      %1435 = vst.msk [vmem:[%s279 + $0x140] sm:$0xff] %vm1414, %v1359
      %1436 = vst.msk [vmem:[%s279 + $0x148] sm:$0xff] %vm1414, %v1361
      %1437 = vst.msk [vmem:[%s279 + $0x160] sm:$0xff] %vm1414, %v1363
      %1438 = vst.msk [vmem:[%s279 + $0x168] sm:$0xff] %vm1414, %v1365
      %1439 = vst.msk [vmem:[%s279 + $0x180] sm:$0xff] %vm1414, %v1367
      %1440 = vst.msk [vmem:[%s279 + $0x188] sm:$0xff] %vm1414, %v1369
      %1441 = vst.msk [vmem:[%s279 + $0x1a0] sm:$0xff] %vm1414, %v1371
      %1442 = vst.msk [vmem:[%s279 + $0x1a8] sm:$0xff] %vm1414, %v1373
      %1443 = vst.msk [vmem:[%s279 + $0x1c0] sm:$0xff] %vm1414, %v1375
      %1444 = vst.msk [vmem:[%s279 + $0x1c8] sm:$0xff] %vm1414, %v1377
      %1445 = vst.msk [vmem:[%s279 + $0x1e0] sm:$0xff] %vm1414, %v1379
      %1446 = vst.msk [vmem:[%s279 + $0x1e8] sm:$0xff] %vm1414, %v1381
      %1447 = vrot.lane.b32.xlu0 %v517, 96
      %v1448 = vpop.permute.xlu0 %1447
      %1449 = vrot.lane.b32.xlu0 %v520, 96
      %v1450 = vpop.permute.xlu0 %1449
      %1451 = vrot.lane.b32.xlu0 %v525, 96
      %v1452 = vpop.permute.xlu0 %1451
      %1453 = vrot.lane.b32.xlu0 %v528, 96
      %v1454 = vpop.permute.xlu0 %1453
      %1455 = vrot.lane.b32.xlu0 %v533, 96
      %v1456 = vpop.permute.xlu0 %1455
      %1457 = vrot.lane.b32.xlu0 %v536, 96
      %v1458 = vpop.permute.xlu0 %1457
      %1459 = vrot.lane.b32.xlu0 %v541, 96
      %v1460 = vpop.permute.xlu0 %1459
      %1461 = vrot.lane.b32.xlu0 %v544, 96
      %v1462 = vpop.permute.xlu0 %1461
      %1463 = vrot.lane.b32.xlu0 %v549, 96
      %v1464 = vpop.permute.xlu0 %1463
      %1465 = vrot.lane.b32.xlu0 %v552, 96
      %v1466 = vpop.permute.xlu0 %1465
      %1467 = vrot.lane.b32.xlu0 %v557, 96
      %v1468 = vpop.permute.xlu0 %1467
      %1469 = vrot.lane.b32.xlu0 %v560, 96
      %v1470 = vpop.permute.xlu0 %1469
      %1471 = vrot.lane.b32.xlu0 %v565, 96
      %v1472 = vpop.permute.xlu0 %1471
      %1473 = vrot.lane.b32.xlu0 %v568, 96
      %v1474 = vpop.permute.xlu0 %1473
      %1475 = vrot.lane.b32.xlu0 %v573, 96
      %v1476 = vpop.permute.xlu0 %1475
      %1477 = vrot.lane.b32.xlu0 %v576, 96
      %v1478 = vpop.permute.xlu0 %1477
      %1479 = vrot.lane.b32.xlu0 %v581, 96
      %v1480 = vpop.permute.xlu0 %1479
      %1481 = vrot.lane.b32.xlu0 %v584, 96
      %v1482 = vpop.permute.xlu0 %1481
      %1483 = vrot.lane.b32.xlu0 %v589, 96
      %v1484 = vpop.permute.xlu0 %1483
      %1485 = vrot.lane.b32.xlu0 %v592, 96
      %v1486 = vpop.permute.xlu0 %1485
      %1487 = vrot.lane.b32.xlu0 %v597, 96
      %v1488 = vpop.permute.xlu0 %1487
      %1489 = vrot.lane.b32.xlu0 %v600, 96
      %v1490 = vpop.permute.xlu0 %1489
      %1491 = vrot.lane.b32.xlu0 %v605, 96
      %v1492 = vpop.permute.xlu0 %1491
      %1493 = vrot.lane.b32.xlu0 %v608, 96
      %v1494 = vpop.permute.xlu0 %1493
      %1495 = vrot.lane.b32.xlu0 %v613, 96
      %v1496 = vpop.permute.xlu0 %1495
      %1497 = vrot.lane.b32.xlu0 %v616, 96
      %v1498 = vpop.permute.xlu0 %1497
      %1499 = vrot.lane.b32.xlu0 %v621, 96
      %v1500 = vpop.permute.xlu0 %1499
      %1501 = vrot.lane.b32.xlu0 %v624, 96
      %v1502 = vpop.permute.xlu0 %1501
      %1503 = vrot.lane.b32.xlu0 %v629, 96
      %v1504 = vpop.permute.xlu0 %1503
      %1505 = vrot.lane.b32.xlu0 %v632, 96
      %v1506 = vpop.permute.xlu0 %1505
      %1507 = vrot.lane.b32.xlu0 %v637, 96
      %v1508 = vpop.permute.xlu0 %1507
      %1509 = vrot.lane.b32.xlu0 %v640, 96
      %v1510 = vpop.permute.xlu0 %1509
      %s1543 = scalar_lea.vmem %s279, 16
      %1544 = vst.msk [vmem:[%s1543] sm:$0xff] %vm1285, %v1448
      %1545 = vst.msk [vmem:[%s1543 + $0x8] sm:$0xff] %vm1285, %v1450
      %1546 = vst.msk [vmem:[%s1543 + $0x20] sm:$0xff] %vm1285, %v1452
      %1547 = vst.msk [vmem:[%s1543 + $0x28] sm:$0xff] %vm1285, %v1454
      %1548 = vst.msk [vmem:[%s1543 + $0x40] sm:$0xff] %vm1285, %v1456
      %1549 = vst.msk [vmem:[%s1543 + $0x48] sm:$0xff] %vm1285, %v1458
      %1550 = vst.msk [vmem:[%s1543 + $0x60] sm:$0xff] %vm1285, %v1460
      %1551 = vst.msk [vmem:[%s1543 + $0x68] sm:$0xff] %vm1285, %v1462
      %1552 = vst.msk [vmem:[%s1543 + $0x80] sm:$0xff] %vm1285, %v1464
      %1553 = vst.msk [vmem:[%s1543 + $0x88] sm:$0xff] %vm1285, %v1466
      %1554 = vst.msk [vmem:[%s1543 + $0xa0] sm:$0xff] %vm1285, %v1468
      %1555 = vst.msk [vmem:[%s1543 + $0xa8] sm:$0xff] %vm1285, %v1470
      %1556 = vst.msk [vmem:[%s1543 + $0xc0] sm:$0xff] %vm1285, %v1472
      %1557 = vst.msk [vmem:[%s1543 + $0xc8] sm:$0xff] %vm1285, %v1474
      %1558 = vst.msk [vmem:[%s1543 + $0xe0] sm:$0xff] %vm1285, %v1476
      %1559 = vst.msk [vmem:[%s1543 + $0xe8] sm:$0xff] %vm1285, %v1478
      %1560 = vst.msk [vmem:[%s1543 + $0x100] sm:$0xff] %vm1285, %v1480
      %1561 = vst.msk [vmem:[%s1543 + $0x108] sm:$0xff] %vm1285, %v1482
      %1562 = vst.msk [vmem:[%s1543 + $0x120] sm:$0xff] %vm1285, %v1484
      %1563 = vst.msk [vmem:[%s1543 + $0x128] sm:$0xff] %vm1285, %v1486
      %1564 = vst.msk [vmem:[%s1543 + $0x140] sm:$0xff] %vm1285, %v1488
      %1565 = vst.msk [vmem:[%s1543 + $0x148] sm:$0xff] %vm1285, %v1490
      %1566 = vst.msk [vmem:[%s1543 + $0x160] sm:$0xff] %vm1285, %v1492
      %1567 = vst.msk [vmem:[%s1543 + $0x168] sm:$0xff] %vm1285, %v1494
      %1568 = vst.msk [vmem:[%s1543 + $0x180] sm:$0xff] %vm1285, %v1496
      %1569 = vst.msk [vmem:[%s1543 + $0x188] sm:$0xff] %vm1285, %v1498
      %1570 = vst.msk [vmem:[%s1543 + $0x1a0] sm:$0xff] %vm1285, %v1500
      %1571 = vst.msk [vmem:[%s1543 + $0x1a8] sm:$0xff] %vm1285, %v1502
      %1572 = vst.msk [vmem:[%s1543 + $0x1c0] sm:$0xff] %vm1285, %v1504
      %1573 = vst.msk [vmem:[%s1543 + $0x1c8] sm:$0xff] %vm1285, %v1506
      %1574 = vst.msk [vmem:[%s1543 + $0x1e0] sm:$0xff] %vm1285, %v1508
      %1575 = vst.msk [vmem:[%s1543 + $0x1e8] sm:$0xff] %vm1285, %v1510
      %1576 = vst.msk [vmem:[%s1543] sm:$0xff] %vm1414, %v517
      %1577 = vst.msk [vmem:[%s1543 + $0x8] sm:$0xff] %vm1414, %v520
      %1578 = vst.msk [vmem:[%s1543 + $0x20] sm:$0xff] %vm1414, %v525
      %1579 = vst.msk [vmem:[%s1543 + $0x28] sm:$0xff] %vm1414, %v528
      %1580 = vst.msk [vmem:[%s1543 + $0x40] sm:$0xff] %vm1414, %v533
      %1581 = vst.msk [vmem:[%s1543 + $0x48] sm:$0xff] %vm1414, %v536
      %1582 = vst.msk [vmem:[%s1543 + $0x60] sm:$0xff] %vm1414, %v541
      %1583 = vst.msk [vmem:[%s1543 + $0x68] sm:$0xff] %vm1414, %v544
      %1584 = vst.msk [vmem:[%s1543 + $0x80] sm:$0xff] %vm1414, %v549
      %1585 = vst.msk [vmem:[%s1543 + $0x88] sm:$0xff] %vm1414, %v552
      %1586 = vst.msk [vmem:[%s1543 + $0xa0] sm:$0xff] %vm1414, %v557
      %1587 = vst.msk [vmem:[%s1543 + $0xa8] sm:$0xff] %vm1414, %v560
      %1588 = vst.msk [vmem:[%s1543 + $0xc0] sm:$0xff] %vm1414, %v565
      %1589 = vst.msk [vmem:[%s1543 + $0xc8] sm:$0xff] %vm1414, %v568
      %1590 = vst.msk [vmem:[%s1543 + $0xe0] sm:$0xff] %vm1414, %v573
      %1591 = vst.msk [vmem:[%s1543 + $0xe8] sm:$0xff] %vm1414, %v576
      %1592 = vst.msk [vmem:[%s1543 + $0x100] sm:$0xff] %vm1414, %v581
      %1593 = vst.msk [vmem:[%s1543 + $0x108] sm:$0xff] %vm1414, %v584
      %1594 = vst.msk [vmem:[%s1543 + $0x120] sm:$0xff] %vm1414, %v589
      %1595 = vst.msk [vmem:[%s1543 + $0x128] sm:$0xff] %vm1414, %v592
      %1596 = vst.msk [vmem:[%s1543 + $0x140] sm:$0xff] %vm1414, %v597
      %1597 = vst.msk [vmem:[%s1543 + $0x148] sm:$0xff] %vm1414, %v600
      %1598 = vst.msk [vmem:[%s1543 + $0x160] sm:$0xff] %vm1414, %v605
      %1599 = vst.msk [vmem:[%s1543 + $0x168] sm:$0xff] %vm1414, %v608
      %1600 = vst.msk [vmem:[%s1543 + $0x180] sm:$0xff] %vm1414, %v613
      %1601 = vst.msk [vmem:[%s1543 + $0x188] sm:$0xff] %vm1414, %v616
      %1602 = vst.msk [vmem:[%s1543 + $0x1a0] sm:$0xff] %vm1414, %v621
      %1603 = vst.msk [vmem:[%s1543 + $0x1a8] sm:$0xff] %vm1414, %v624
      %1604 = vst.msk [vmem:[%s1543 + $0x1c0] sm:$0xff] %vm1414, %v629
      %1605 = vst.msk [vmem:[%s1543 + $0x1c8] sm:$0xff] %vm1414, %v632
      %1606 = vst.msk [vmem:[%s1543 + $0x1e0] sm:$0xff] %vm1414, %v637
      %1607 = vst.msk [vmem:[%s1543 + $0x1e8] sm:$0xff] %vm1414, %v640
      %s1608 = smul.u32 16, %s20
      %p1609 = scmp.lt.s32.totalorder %s19, 1
      %s1610 = scalar_select %p1609, %s19, 1
      %p1611 = scmp.lt.s32.totalorder %s1608, 15
      %s1612 = scalar_select %p1611, %s1608, 15
      %s1613 = smul.addr %s1612, 4
      %s1614 = smul.addr %s1610, 64
      %s1615 = sadd.s32 %s1613, %s1614
      %s1616 = smul.addr %s1615, 8
      %s1617 = scalar_lea.vmem %s4, %s1616
      // Predicated region
      $region37: #{up_forward.1} parent=35 // pred_check
        %p1618 = pneg %p145
      $region38: #{up_forward.1} parent=35 // pred_check_branch
        %1620 = sbr.rel (%p1618) target = $region40
      $region39: #{up_forward.1} parent=35 // pred_region
        %s1621 = smul.u32 16, %s20
      $region40: #{up_forward.1} parent=35 // pred_fallthru
        _
    $region36: #{up_forward.1} parent=5 // pred_fallthru
      _
    %p1622 = scmp.le.s32.totalorder 2, %s10
    // Predicated region
    $region41: #{up_forward.1} parent=5 // pred_check
      %p1623 = pneg %p1622
    $region42: #{up_forward.1} parent=5 // pred_check_branch
      %1625 = sbr.rel (%p1623) target = $region44
    $region43: #{up_forward.1} parent=5 // pred_region
      %s1626 = ssub.s32 %s10, 2
      // Predicated region
      $region45: #{up_forward.1} parent=43 // pred_check
        %p1627 = pneg %p151
      $region46: #{up_forward.1} parent=43 // pred_check_branch
        %1629 = sbr.rel (%p1627) target = $region48
      $region47: #{up_forward.1} parent=43 // pred_region
        %s1630 = smul.u32 16, %s22
        %p1631 = scmp.lt.s32.totalorder %s21, 1
        %s1632 = scalar_select %p1631, %s21, 1
        %p1633 = scmp.lt.s32.totalorder %s1630, 15
        %s1634 = scalar_select %p1633, %s1630, 15
        %s1635 = smul.addr %s1634, 4
        %s1636 = smul.addr %s1632, 64
        %s1637 = sadd.s32 %s1635, %s1636
        %s1638 = smul.addr %s1637, 8
        %s1639 = scalar_lea.vmem %s4, %s1638
      $region48: #{up_forward.1} parent=43 // pred_fallthru
        _
    $region44: #{up_forward.1} parent=5 // pred_fallthru
      _
  $region6: #{up_forward.1} parent=0 // loop_footer
    %s14 = sadd.s32 1, %s10
  $region7: #{up_forward.1} parent=0 // loop_footer_branch
    %9 = sbr.rel target = $region3
  $region8: #{up_forward.1} parent=0 // loop_exit
    _

</llo_original>
